<compile_context>
chip_gen: v5e
topology: v5e:2x2
jax: 0.10.0
libtpu: 0.0.40
codegen_flags: <defaults>
</compile_context>

<pallas_src>
import functools
import math

import jax
import jax.numpy as jnp
from jax.experimental import pallas as pl
from jax.experimental.pallas import tpu as pltpu


# ---------------- small synthetic BERT config ----------------
VOCAB = 64
HIDDEN = 32
N_LAYERS = 2
N_HEADS = 2
HEAD_DIM = HIDDEN // N_HEADS
INTERMEDIATE = 64
MAX_POS = 16
BATCH = 2
SEQ = 8
LN_EPS = 1e-12


# ---------------- the single fused Pallas kernel ----------------
def _fused_bert_kernel(
    x_ref, bid_row_ref, bid_col_ref, keym_ref, emb_g_ref, emb_b_ref,
    wqkv_ref, bqkv_ref, wo_ref, bo_ref, ln1g_ref, ln1b_ref,
    w1_ref, b1_ref, w2_ref, b2_ref, ln2g_ref, ln2b_ref,
    bert_pw_ref, bert_pb_ref, nnd_w_ref, nnd_b_ref,
    pool_w_ref, pool_b_ref, cls_w_ref, cls_b_ref,
    o_ref, *, use_all_layer):
    """Whole forward pass on a [T = B*S, HIDDEN] token slab, weights in VMEM."""

    def ln(x, g, b):
        mu = jnp.mean(x, axis=-1, keepdims=True)
        var = jnp.mean(jnp.square(x - mu), axis=-1, keepdims=True)
        return (x - mu) * jax.lax.rsqrt(var + LN_EPS) * g + b

    def mm(a, b):
        return jnp.dot(a, b, preferred_element_type=jnp.float32)

    scale = 1.0 / math.sqrt(HEAD_DIM)

    # ---- block-diagonal additive attention bias, built in-kernel ----
    # 0 where (same batch AND key unmasked), -1e4 otherwise.
    same = (bid_row_ref[...] == bid_col_ref[...]).astype(jnp.float32)   # (T, T)
    bias = (1.0 - same * keym_ref[...]) * -10000.0                      # (T, T)

    # embeddings LayerNorm
    h = ln(x_ref[...], emb_g_ref[...], emb_b_ref[...])                  # (T, H)
    T = h.shape[0]

    hs = []                                                # per-layer hidden states
    for l in range(N_LAYERS):
        # ---- fused QKV projection: one (T,H) @ (H,3H) matmul ----
        qkv = mm(h, wqkv_ref[l]) + bqkv_ref[l]             # (T, 3H)
        wo_l = wo_ref[l]                                   # (H, H)

        # ---- attention over all batches/heads at once (block-diag bias) ----
        attn = jnp.zeros((T, HIDDEN), jnp.float32)
        for hd in range(N_HEADS):
            lo = hd * HEAD_DIM
            qh = qkv[:, lo:lo + HEAD_DIM] * scale                       # (T, Dh)
            kh = qkv[:, HIDDEN + lo:HIDDEN + lo + HEAD_DIM]             # (T, Dh)
            vh = qkv[:, 2 * HIDDEN + lo:2 * HIDDEN + lo + HEAD_DIM]     # (T, Dh)
            s = jax.lax.dot_general(
                qh, kh, (((1,), (1,)), ((), ())),
                preferred_element_type=jnp.float32)                     # (T, T)
            s = s + bias
            s = s - jnp.max(s, axis=-1, keepdims=True)
            p = jnp.exp(s)
            p = p * pl.reciprocal(jnp.sum(p, axis=-1, keepdims=True), approx=True)
            ctx = mm(p, vh)                                             # (T, Dh)
            # fold output projection per head: sum_h ctx_h @ Wo[h*Dh:(h+1)*Dh, :]
            attn = attn + mm(ctx, wo_l[lo:lo + HEAD_DIM, :])
        attn = attn + bo_ref[l]

        h = ln(h + attn, ln1g_ref[l], ln1b_ref[l])
        # TODO(synk): HF BERT uses exact erf GELU; tanh-approximate GELU used
        # here (small numeric divergence, backbone is synthetic anyway).
        inter = jax.nn.gelu(mm(h, w1_ref[l]) + b1_ref[l], approximate=True)
        ffn = mm(inter, w2_ref[l]) + b2_ref[l]
        h = ln(h + ffn, ln2g_ref[l], ln2b_ref[l])
        hs.append(h)

    if use_all_layer:
        # per-layer ReLU logit -> softmax over layers -> layer-weighted mix
        logits_l = [jnp.maximum(mm(hl, nnd_w_ref[...]) + nnd_b_ref[...], 0.0)
                    for hl in hs]                          # each (T, 1)
        mx = logits_l[0]
        for t in logits_l[1:]:
            mx = jnp.maximum(mx, t)
        exps = [jnp.exp(t - mx) for t in logits_l]
        denom = exps[0]
        for e in exps[1:]:
            denom = denom + e
        inv = pl.reciprocal(denom, approx=True)
        mix = (exps[0] * inv) * hs[0]
        for e, hl in zip(exps[1:], hs[1:]):
            mix = mix + (e * inv) * hl                     # (T, H)
        pooled = jnp.tanh(mm(mix, pool_w_ref[...]) + pool_b_ref[...])
    else:
        # standard BERT pooler branch (tanh(W h + b)); applied to all tokens,
        # CLS rows are selected outside the kernel (row-wise op, identical).
        pooled = jnp.tanh(mm(hs[-1], bert_pw_ref[...]) + bert_pb_ref[...])

    # TODO(synk): nn.Dropout(p=0.9) before the classifier is identity at
    # inference; training-mode stochastic dropout not modeled.
    o_ref[...] = mm(pooled, cls_w_ref[...]) + cls_b_ref[...]


# ---------------- deterministic parameters ----------------
def init_params(key):
    keys = iter(jax.random.split(key, 32))

    def nrm(shape, std=0.02):
        return jax.random.normal(next(keys), shape, jnp.float32) * std

    p = {
        "word_emb": nrm((VOCAB, HIDDEN)),
        "pos_emb": nrm((MAX_POS, HIDDEN)),
        "type_emb": nrm((2, HIDDEN)),
        "emb_ln_g": jnp.ones((HIDDEN,), jnp.float32),
        "emb_ln_b": jnp.zeros((HIDDEN,), jnp.float32),
        "layers": [],
        "bert_pooler_w": nrm((HIDDEN, HIDDEN)),
        "bert_pooler_b": jnp.zeros((HIDDEN,), jnp.float32),
        # head (truncated_normal_(std=0.02) in torch -> deterministic normal*0.02 here)
        "nn_dense_w": nrm((HIDDEN, 1)),
        "nn_dense_b": jnp.zeros((1,), jnp.float32),
        "pooler_w": nrm((HIDDEN, HIDDEN)),
        "pooler_b": jnp.zeros((HIDDEN,), jnp.float32),
        "cls_w": nrm((HIDDEN, 2)),
        "cls_b": jnp.zeros((2,), jnp.float32),
    }
    for _ in range(N_LAYERS):
        p["layers"].append(dict(
            wq=nrm((HIDDEN, HIDDEN)), bq=jnp.zeros((HIDDEN,), jnp.float32),
            wk=nrm((HIDDEN, HIDDEN)), bk=jnp.zeros((HIDDEN,), jnp.float32),
            wv=nrm((HIDDEN, HIDDEN)), bv=jnp.zeros((HIDDEN,), jnp.float32),
            wo=nrm((HIDDEN, HIDDEN)), bo=jnp.zeros((HIDDEN,), jnp.float32),
            ln1_g=jnp.ones((HIDDEN,), jnp.float32), ln1_b=jnp.zeros((HIDDEN,), jnp.float32),
            w1=nrm((HIDDEN, INTERMEDIATE)), b1=jnp.zeros((INTERMEDIATE,), jnp.float32),
            w2=nrm((INTERMEDIATE, HIDDEN)), b2=jnp.zeros((HIDDEN,), jnp.float32),
            ln2_g=jnp.ones((HIDDEN,), jnp.float32), ln2_b=jnp.zeros((HIDDEN,), jnp.float32),
        ))
    return p


def _pack_params(p):
    """Stack per-layer weights along a leading layer axis; fuse Q/K/V."""
    layers = p["layers"]

    def stk(f):
        return jnp.stack([f(l) for l in layers], axis=0)

    return [
        stk(lambda l: jnp.concatenate([l["wq"], l["wk"], l["wv"]], axis=1)),   # (L,H,3H)
        stk(lambda l: jnp.concatenate([l["bq"], l["bk"], l["bv"]])[None, :]),  # (L,1,3H)
        stk(lambda l: l["wo"]),                       # (L,H,H)
        stk(lambda l: l["bo"][None, :]),              # (L,1,H)
        stk(lambda l: l["ln1_g"][None, :]),           # (L,1,H)
        stk(lambda l: l["ln1_b"][None, :]),           # (L,1,H)
        stk(lambda l: l["w1"]),                       # (L,H,I)
        stk(lambda l: l["b1"][None, :]),              # (L,1,I)
        stk(lambda l: l["w2"]),                       # (L,I,H)
        stk(lambda l: l["b2"][None, :]),              # (L,1,H)
        stk(lambda l: l["ln2_g"][None, :]),           # (L,1,H)
        stk(lambda l: l["ln2_b"][None, :]),           # (L,1,H)
        p["bert_pooler_w"], p["bert_pooler_b"][None, :],
        p["nn_dense_w"], p["nn_dense_b"].reshape(1, 1),
        p["pooler_w"], p["pooler_b"][None, :],
        p["cls_w"], p["cls_b"][None, :],
    ]


# ---------------- forward pass (one pallas_call) ----------------
@functools.partial(jax.jit, static_argnames=("use_all_layer",))
def my_bert_model_forward(params, input_ids, attention_mask, use_all_layer=False):
    B, S = input_ids.shape
    T = B * S

    # Embedding table lookups (gathers) stay as XLA glue; token_type id is 0.
    x = (params["word_emb"][input_ids]
         + params["pos_emb"][jnp.arange(S)][None, :, :]
         + params["type_emb"][0][None, None, :]).reshape(T, HIDDEN).astype(jnp.float32)

    # O(T) mask inputs: per-token batch id (row & col layouts) and key mask.
    # The (T, T) block-diagonal additive bias is built inside the kernel.
    bid = jnp.repeat(jnp.arange(B, dtype=jnp.float32), S)           # (T,)
    bid_row = bid.reshape(T, 1)
    bid_col = bid.reshape(1, T)
    keym = attention_mask.astype(jnp.float32).reshape(1, T)

    args = (x, bid_row, bid_col, keym,
            params["emb_ln_g"][None, :], params["emb_ln_b"][None, :],
            *_pack_params(params))

    vmem = pl.BlockSpec(memory_space=pltpu.MemorySpace.VMEM)
    logits_all = pl.pallas_call(
        functools.partial(_fused_bert_kernel, use_all_layer=use_all_layer),
        out_shape=jax.ShapeDtypeStruct((T, 2), jnp.float32),
        in_specs=[vmem] * len(args),
        out_specs=vmem,
    )(*args)                                                        # (T, 2)

    # select the CLS token per batch (pooler/classifier are row-wise, so
    # computing them for all tokens and slicing here is exact).
    return logits_all.reshape(B, S, 2)[:, 0, :]


if __name__ == "__main__":
    key = jax.random.PRNGKey(0)
    pkey, ikey = jax.random.split(key)
    params = init_params(pkey)
    input_ids = jax.random.randint(ikey, (BATCH, SEQ), 0, VOCAB, dtype=jnp.int32)
    attention_mask = jnp.ones((BATCH, SEQ), dtype=jnp.int32)

    out_pooler = my_bert_model_forward(params, input_ids, attention_mask,
                                       use_all_layer=False)
    out_mix = my_bert_model_forward(params, input_ids, attention_mask,
                                    use_all_layer=True)
    out_pooler, out_mix = jax.block_until_ready((out_pooler, out_mix))

    assert out_pooler.shape == (BATCH, 2) and out_pooler.dtype == jnp.float32
    assert out_mix.shape == (BATCH, 2) and out_mix.dtype == jnp.float32
    assert bool(jnp.all(jnp.isfinite(out_pooler))) and bool(jnp.all(jnp.isfinite(out_mix)))
    print("KERNEL_OK")
</pallas_src>

<mosaic_0001>
module attributes {stable_mosaic.version = 11 : i64} {
  func.func @_fused_bert_kernel(%arg0: memref<16x32xf32, #tpu.memory_space<vmem>>, %arg1: memref<16x1xf32, #tpu.memory_space<vmem>>, %arg2: memref<1x16xf32, #tpu.memory_space<vmem>>, %arg3: memref<1x16xf32, #tpu.memory_space<vmem>>, %arg4: memref<1x32xf32, #tpu.memory_space<vmem>>, %arg5: memref<1x32xf32, #tpu.memory_space<vmem>>, %arg6: memref<2x32x96xf32, #tpu.memory_space<vmem>>, %arg7: memref<2x1x96xf32, #tpu.memory_space<vmem>>, %arg8: memref<2x32x32xf32, #tpu.memory_space<vmem>>, %arg9: memref<2x1x32xf32, #tpu.memory_space<vmem>>, %arg10: memref<2x1x32xf32, #tpu.memory_space<vmem>>, %arg11: memref<2x1x32xf32, #tpu.memory_space<vmem>>, %arg12: memref<2x32x64xf32, #tpu.memory_space<vmem>>, %arg13: memref<2x1x64xf32, #tpu.memory_space<vmem>>, %arg14: memref<2x64x32xf32, #tpu.memory_space<vmem>>, %arg15: memref<2x1x32xf32, #tpu.memory_space<vmem>>, %arg16: memref<2x1x32xf32, #tpu.memory_space<vmem>>, %arg17: memref<2x1x32xf32, #tpu.memory_space<vmem>>, %arg18: memref<32x32xf32, #tpu.memory_space<vmem>>, %arg19: memref<1x32xf32, #tpu.memory_space<vmem>>, %arg20: memref<32x1xf32, #tpu.memory_space<vmem>>, %arg21: memref<1x1xf32, #tpu.memory_space<vmem>>, %arg22: memref<32x32xf32, #tpu.memory_space<vmem>>, %arg23: memref<1x32xf32, #tpu.memory_space<vmem>>, %arg24: memref<32x2xf32, #tpu.memory_space<vmem>>, %arg25: memref<1x2xf32, #tpu.memory_space<vmem>>, %arg26: memref<16x2xf32, #tpu.memory_space<vmem>>) attributes {dimension_semantics = [], scalar_prefetch = 0 : i64, scratch_operands = 0 : i64, tpu.core_type = #tpu.core_type<tc>} {
    %c0 = arith.constant 0 : index
    %c0_0 = arith.constant 0 : index
    %0 = vector.load %arg1[%c0, %c0_0] : memref<16x1xf32, #tpu.memory_space<vmem>>, vector<16x1xf32>
    %c0_1 = arith.constant 0 : index
    %c0_2 = arith.constant 0 : index
    %1 = vector.load %arg2[%c0_1, %c0_2] : memref<1x16xf32, #tpu.memory_space<vmem>>, vector<1x16xf32>
    %2 = vector.broadcast %0 : vector<16x1xf32> to vector<16x16xf32>
    %3 = vector.broadcast %1 : vector<1x16xf32> to vector<16x16xf32>
    %4 = arith.cmpf oeq, %2, %3 : vector<16x16xf32>
    %5 = arith.extui %4 : vector<16x16xi1> to vector<16x16xi32>
    %6 = arith.sitofp %5 : vector<16x16xi32> to vector<16x16xf32>
    %c0_3 = arith.constant 0 : index
    %c0_4 = arith.constant 0 : index
    %7 = vector.load %arg3[%c0_3, %c0_4] : memref<1x16xf32, #tpu.memory_space<vmem>>, vector<1x16xf32>
    %8 = vector.broadcast %7 : vector<1x16xf32> to vector<16x16xf32>
    %9 = arith.mulf %6, %8 : vector<16x16xf32>
    %cst = arith.constant 1.000000e+00 : f32
    %10 = vector.broadcast %cst : f32 to vector<16x16xf32>
    %11 = arith.subf %10, %9 : vector<16x16xf32>
    %cst_5 = arith.constant -1.000000e+04 : f32
    %12 = vector.broadcast %cst_5 : f32 to vector<16x16xf32>
    %13 = arith.mulf %11, %12 : vector<16x16xf32>
    %c0_6 = arith.constant 0 : index
    %c0_7 = arith.constant 0 : index
    %14 = vector.load %arg0[%c0_6, %c0_7] : memref<16x32xf32, #tpu.memory_space<vmem>>, vector<16x32xf32>
    %c0_8 = arith.constant 0 : index
    %c0_9 = arith.constant 0 : index
    %15 = vector.load %arg4[%c0_8, %c0_9] : memref<1x32xf32, #tpu.memory_space<vmem>>, vector<1x32xf32>
    %c0_10 = arith.constant 0 : index
    %c0_11 = arith.constant 0 : index
    %16 = vector.load %arg5[%c0_10, %c0_11] : memref<1x32xf32, #tpu.memory_space<vmem>>, vector<1x32xf32>
    %cst_12 = arith.constant dense<0.000000e+00> : vector<16xf32>
    %17 = vector.multi_reduction <add>, %14, %cst_12 [1] : vector<16x32xf32> to vector<16xf32>
    %18 = vector.shape_cast %17 : vector<16xf32> to vector<16x1xf32>
    %cst_13 = arith.constant 3.200000e+01 : f32
    %19 = vector.broadcast %cst_13 : f32 to vector<16x1xf32>
    %20 = arith.divf %18, %19 : vector<16x1xf32>
    %21 = vector.broadcast %20 : vector<16x1xf32> to vector<16x32xf32>
    %22 = arith.subf %14, %21 : vector<16x32xf32>
    %23 = arith.mulf %22, %22 : vector<16x32xf32>
    %cst_14 = arith.constant dense<0.000000e+00> : vector<16xf32>
    %24 = vector.multi_reduction <add>, %23, %cst_14 [1] : vector<16x32xf32> to vector<16xf32>
    %25 = vector.shape_cast %24 : vector<16xf32> to vector<16x1xf32>
    %cst_15 = arith.constant 3.200000e+01 : f32
    %26 = vector.broadcast %cst_15 : f32 to vector<16x1xf32>
    %27 = arith.divf %25, %26 : vector<16x1xf32>
    %28 = vector.broadcast %20 : vector<16x1xf32> to vector<16x32xf32>
    %29 = arith.subf %14, %28 : vector<16x32xf32>
    %cst_16 = arith.constant 9.99999996E-13 : f32
    %30 = vector.broadcast %cst_16 : f32 to vector<16x1xf32>
    %31 = arith.addf %27, %30 : vector<16x1xf32>
    %32 = math.rsqrt %31 : vector<16x1xf32>
    %33 = vector.broadcast %32 : vector<16x1xf32> to vector<16x32xf32>
    %34 = arith.mulf %29, %33 : vector<16x32xf32>
    %35 = vector.broadcast %15 : vector<1x32xf32> to vector<16x32xf32>
    %36 = arith.mulf %34, %35 : vector<16x32xf32>
    %37 = vector.broadcast %16 : vector<1x32xf32> to vector<16x32xf32>
    %38 = arith.addf %36, %37 : vector<16x32xf32>
    %c0_17 = arith.constant 0 : index
    %c0_18 = arith.constant 0 : index
    %c0_19 = arith.constant 0 : index
    %39 = vector.load %arg6[%c0_17, %c0_18, %c0_19] : memref<2x32x96xf32, #tpu.memory_space<vmem>>, vector<1x32x96xf32>
    %40 = vector.shape_cast %39 : vector<1x32x96xf32> to vector<32x96xf32>
    %cst_20 = arith.constant dense<0.000000e+00> : vector<16x96xf32>
    %41 = tpu.matmul %38, %40, %cst_20 {dimension_numbers = #tpu.dot_dimension_numbers<[1], [0], [0], [1], [0, 0, 1, 1], [], []>} : vector<16x32xf32>, vector<32x96xf32>, vector<16x96xf32> -> vector<16x96xf32>
    %c0_21 = arith.constant 0 : index
    %c0_22 = arith.constant 0 : index
    %c0_23 = arith.constant 0 : index
    %42 = vector.load %arg7[%c0_21, %c0_22, %c0_23] : memref<2x1x96xf32, #tpu.memory_space<vmem>>, vector<1x1x96xf32>
    %43 = vector.shape_cast %42 : vector<1x1x96xf32> to vector<1x96xf32>
    %44 = vector.broadcast %43 : vector<1x96xf32> to vector<16x96xf32>
    %45 = arith.addf %41, %44 : vector<16x96xf32>
    %c0_24 = arith.constant 0 : index
    %c0_25 = arith.constant 0 : index
    %c0_26 = arith.constant 0 : index
    %46 = vector.load %arg8[%c0_24, %c0_25, %c0_26] : memref<2x32x32xf32, #tpu.memory_space<vmem>>, vector<1x32x32xf32>
    %47 = vector.shape_cast %46 : vector<1x32x32xf32> to vector<32x32xf32>
    %cst_27 = arith.constant 0.000000e+00 : f32
    %48 = vector.broadcast %cst_27 : f32 to vector<16x32xf32>
    %49 = vector.extract_strided_slice %45 {offsets = [0, 0], sizes = [16, 16], strides = [1, 1]} : vector<16x96xf32> to vector<16x16xf32>
    %cst_28 = arith.constant 2.500000e-01 : f32
    %50 = vector.broadcast %cst_28 : f32 to vector<16x16xf32>
    %51 = arith.mulf %49, %50 : vector<16x16xf32>
    %52 = vector.extract_strided_slice %45 {offsets = [0, 32], sizes = [16, 16], strides = [1, 1]} : vector<16x96xf32> to vector<16x16xf32>
    %53 = vector.extract_strided_slice %45 {offsets = [0, 64], sizes = [16, 16], strides = [1, 1]} : vector<16x96xf32> to vector<16x16xf32>
    %cst_29 = arith.constant dense<0.000000e+00> : vector<16x16xf32>
    %54 = tpu.matmul %51, %52, %cst_29 {dimension_numbers = #tpu.dot_dimension_numbers<[1], [1], [0], [0], [0, 0, 1, 0], [], []>} : vector<16x16xf32>, vector<16x16xf32>, vector<16x16xf32> -> vector<16x16xf32>
    %55 = arith.addf %54, %13 : vector<16x16xf32>
    %cst_30 = arith.constant dense<0xFF800000> : vector<16xf32>
    %56 = vector.multi_reduction <maximumf>, %55, %cst_30 [1] : vector<16x16xf32> to vector<16xf32>
    %57 = vector.shape_cast %56 : vector<16xf32> to vector<16x1xf32>
    %58 = vector.broadcast %57 : vector<16x1xf32> to vector<16x16xf32>
    %59 = arith.subf %55, %58 : vector<16x16xf32>
    %60 = math.exp %59 : vector<16x16xf32>
    %cst_31 = arith.constant dense<0.000000e+00> : vector<16xf32>
    %61 = vector.multi_reduction <add>, %60, %cst_31 [1] : vector<16x16xf32> to vector<16xf32>
    %62 = vector.shape_cast %61 : vector<16xf32> to vector<16x1xf32>
    %63 = tpu.reciprocal %62 {approx = true} : vector<16x1xf32> -> vector<16x1xf32>
    %64 = vector.broadcast %63 : vector<16x1xf32> to vector<16x16xf32>
    %65 = arith.mulf %60, %64 : vector<16x16xf32>
    %cst_32 = arith.constant dense<0.000000e+00> : vector<16x16xf32>
    %66 = tpu.matmul %65, %53, %cst_32 {dimension_numbers = #tpu.dot_dimension_numbers<[1], [0], [0], [1], [0, 0, 1, 1], [], []>} : vector<16x16xf32>, vector<16x16xf32>, vector<16x16xf32> -> vector<16x16xf32>
    %67 = vector.extract_strided_slice %47 {offsets = [0, 0], sizes = [16, 32], strides = [1, 1]} : vector<32x32xf32> to vector<16x32xf32>
    %cst_33 = arith.constant dense<0.000000e+00> : vector<16x32xf32>
    %68 = tpu.matmul %66, %67, %cst_33 {dimension_numbers = #tpu.dot_dimension_numbers<[1], [0], [0], [1], [0, 0, 1, 1], [], []>} : vector<16x16xf32>, vector<16x32xf32>, vector<16x32xf32> -> vector<16x32xf32>
    %69 = arith.addf %48, %68 : vector<16x32xf32>
    %70 = vector.extract_strided_slice %45 {offsets = [0, 16], sizes = [16, 16], strides = [1, 1]} : vector<16x96xf32> to vector<16x16xf32>
    %cst_34 = arith.constant 2.500000e-01 : f32
    %71 = vector.broadcast %cst_34 : f32 to vector<16x16xf32>
    %72 = arith.mulf %70, %71 : vector<16x16xf32>
    %73 = vector.extract_strided_slice %45 {offsets = [0, 48], sizes = [16, 16], strides = [1, 1]} : vector<16x96xf32> to vector<16x16xf32>
    %74 = vector.extract_strided_slice %45 {offsets = [0, 80], sizes = [16, 16], strides = [1, 1]} : vector<16x96xf32> to vector<16x16xf32>
    %cst_35 = arith.constant dense<0.000000e+00> : vector<16x16xf32>
    %75 = tpu.matmul %72, %73, %cst_35 {dimension_numbers = #tpu.dot_dimension_numbers<[1], [1], [0], [0], [0, 0, 1, 0], [], []>} : vector<16x16xf32>, vector<16x16xf32>, vector<16x16xf32> -> vector<16x16xf32>
    %76 = arith.addf %75, %13 : vector<16x16xf32>
    %cst_36 = arith.constant dense<0xFF800000> : vector<16xf32>
    %77 = vector.multi_reduction <maximumf>, %76, %cst_36 [1] : vector<16x16xf32> to vector<16xf32>
    %78 = vector.shape_cast %77 : vector<16xf32> to vector<16x1xf32>
    %79 = vector.broadcast %78 : vector<16x1xf32> to vector<16x16xf32>
    %80 = arith.subf %76, %79 : vector<16x16xf32>
    %81 = math.exp %80 : vector<16x16xf32>
    %cst_37 = arith.constant dense<0.000000e+00> : vector<16xf32>
    %82 = vector.multi_reduction <add>, %81, %cst_37 [1] : vector<16x16xf32> to vector<16xf32>
    %83 = vector.shape_cast %82 : vector<16xf32> to vector<16x1xf32>
    %84 = tpu.reciprocal %83 {approx = true} : vector<16x1xf32> -> vector<16x1xf32>
    %85 = vector.broadcast %84 : vector<16x1xf32> to vector<16x16xf32>
    %86 = arith.mulf %81, %85 : vector<16x16xf32>
    %cst_38 = arith.constant dense<0.000000e+00> : vector<16x16xf32>
    %87 = tpu.matmul %86, %74, %cst_38 {dimension_numbers = #tpu.dot_dimension_numbers<[1], [0], [0], [1], [0, 0, 1, 1], [], []>} : vector<16x16xf32>, vector<16x16xf32>, vector<16x16xf32> -> vector<16x16xf32>
    %88 = vector.extract_strided_slice %47 {offsets = [16, 0], sizes = [16, 32], strides = [1, 1]} : vector<32x32xf32> to vector<16x32xf32>
    %cst_39 = arith.constant dense<0.000000e+00> : vector<16x32xf32>
    %89 = tpu.matmul %87, %88, %cst_39 {dimension_numbers = #tpu.dot_dimension_numbers<[1], [0], [0], [1], [0, 0, 1, 1], [], []>} : vector<16x16xf32>, vector<16x32xf32>, vector<16x32xf32> -> vector<16x32xf32>
    %90 = arith.addf %69, %89 : vector<16x32xf32>
    %c0_40 = arith.constant 0 : index
    %c0_41 = arith.constant 0 : index
    %c0_42 = arith.constant 0 : index
    %91 = vector.load %arg9[%c0_40, %c0_41, %c0_42] : memref<2x1x32xf32, #tpu.memory_space<vmem>>, vector<1x1x32xf32>
    %92 = vector.shape_cast %91 : vector<1x1x32xf32> to vector<1x32xf32>
    %93 = vector.broadcast %92 : vector<1x32xf32> to vector<16x32xf32>
    %94 = arith.addf %90, %93 : vector<16x32xf32>
    %95 = arith.addf %38, %94 : vector<16x32xf32>
    %c0_43 = arith.constant 0 : index
    %c0_44 = arith.constant 0 : index
    %c0_45 = arith.constant 0 : index
    %96 = vector.load %arg10[%c0_43, %c0_44, %c0_45] : memref<2x1x32xf32, #tpu.memory_space<vmem>>, vector<1x1x32xf32>
    %97 = vector.shape_cast %96 : vector<1x1x32xf32> to vector<1x32xf32>
    %c0_46 = arith.constant 0 : index
    %c0_47 = arith.constant 0 : index
    %c0_48 = arith.constant 0 : index
    %98 = vector.load %arg11[%c0_46, %c0_47, %c0_48] : memref<2x1x32xf32, #tpu.memory_space<vmem>>, vector<1x1x32xf32>
    %99 = vector.shape_cast %98 : vector<1x1x32xf32> to vector<1x32xf32>
    %cst_49 = arith.constant dense<0.000000e+00> : vector<16xf32>
    %100 = vector.multi_reduction <add>, %95, %cst_49 [1] : vector<16x32xf32> to vector<16xf32>
    %101 = vector.shape_cast %100 : vector<16xf32> to vector<16x1xf32>
    %cst_50 = arith.constant 3.200000e+01 : f32
    %102 = vector.broadcast %cst_50 : f32 to vector<16x1xf32>
    %103 = arith.divf %101, %102 : vector<16x1xf32>
    %104 = vector.broadcast %103 : vector<16x1xf32> to vector<16x32xf32>
    %105 = arith.subf %95, %104 : vector<16x32xf32>
    %106 = arith.mulf %105, %105 : vector<16x32xf32>
    %cst_51 = arith.constant dense<0.000000e+00> : vector<16xf32>
    %107 = vector.multi_reduction <add>, %106, %cst_51 [1] : vector<16x32xf32> to vector<16xf32>
    %108 = vector.shape_cast %107 : vector<16xf32> to vector<16x1xf32>
    %cst_52 = arith.constant 3.200000e+01 : f32
    %109 = vector.broadcast %cst_52 : f32 to vector<16x1xf32>
    %110 = arith.divf %108, %109 : vector<16x1xf32>
    %111 = vector.broadcast %103 : vector<16x1xf32> to vector<16x32xf32>
    %112 = arith.subf %95, %111 : vector<16x32xf32>
    %cst_53 = arith.constant 9.99999996E-13 : f32
    %113 = vector.broadcast %cst_53 : f32 to vector<16x1xf32>
    %114 = arith.addf %110, %113 : vector<16x1xf32>
    %115 = math.rsqrt %114 : vector<16x1xf32>
    %116 = vector.broadcast %115 : vector<16x1xf32> to vector<16x32xf32>
    %117 = arith.mulf %112, %116 : vector<16x32xf32>
    %118 = vector.broadcast %97 : vector<1x32xf32> to vector<16x32xf32>
    %119 = arith.mulf %117, %118 : vector<16x32xf32>
    %120 = vector.broadcast %99 : vector<1x32xf32> to vector<16x32xf32>
    %121 = arith.addf %119, %120 : vector<16x32xf32>
    %c0_54 = arith.constant 0 : index
    %c0_55 = arith.constant 0 : index
    %c0_56 = arith.constant 0 : index
    %122 = vector.load %arg12[%c0_54, %c0_55, %c0_56] : memref<2x32x64xf32, #tpu.memory_space<vmem>>, vector<1x32x64xf32>
    %123 = vector.shape_cast %122 : vector<1x32x64xf32> to vector<32x64xf32>
    %cst_57 = arith.constant dense<0.000000e+00> : vector<16x64xf32>
    %124 = tpu.matmul %121, %123, %cst_57 {dimension_numbers = #tpu.dot_dimension_numbers<[1], [0], [0], [1], [0, 0, 1, 1], [], []>} : vector<16x32xf32>, vector<32x64xf32>, vector<16x64xf32> -> vector<16x64xf32>
    %c0_58 = arith.constant 0 : index
    %c0_59 = arith.constant 0 : index
    %c0_60 = arith.constant 0 : index
    %125 = vector.load %arg13[%c0_58, %c0_59, %c0_60] : memref<2x1x64xf32, #tpu.memory_space<vmem>>, vector<1x1x64xf32>
    %126 = vector.shape_cast %125 : vector<1x1x64xf32> to vector<1x64xf32>
    %127 = vector.broadcast %126 : vector<1x64xf32> to vector<16x64xf32>
    %128 = arith.addf %124, %127 : vector<16x64xf32>
    %129 = arith.mulf %128, %128 : vector<16x64xf32>
    %130 = arith.mulf %128, %129 : vector<16x64xf32>
    %cst_61 = arith.constant 4.471500e-02 : f32
    %131 = vector.broadcast %cst_61 : f32 to vector<16x64xf32>
    %132 = arith.mulf %131, %130 : vector<16x64xf32>
    %133 = arith.addf %128, %132 : vector<16x64xf32>
    %cst_62 = arith.constant 0.797884583 : f32
    %134 = vector.broadcast %cst_62 : f32 to vector<16x64xf32>
    %135 = arith.mulf %134, %133 : vector<16x64xf32>
    %136 = math.tanh %135 : vector<16x64xf32>
    %cst_63 = arith.constant 1.000000e+00 : f32
    %137 = vector.broadcast %cst_63 : f32 to vector<16x64xf32>
    %138 = arith.addf %137, %136 : vector<16x64xf32>
    %cst_64 = arith.constant 5.000000e-01 : f32
    %139 = vector.broadcast %cst_64 : f32 to vector<16x64xf32>
    %140 = arith.mulf %139, %138 : vector<16x64xf32>
    %141 = arith.mulf %128, %140 : vector<16x64xf32>
    %c0_65 = arith.constant 0 : index
    %c0_66 = arith.constant 0 : index
    %c0_67 = arith.constant 0 : index
    %142 = vector.load %arg14[%c0_65, %c0_66, %c0_67] : memref<2x64x32xf32, #tpu.memory_space<vmem>>, vector<1x64x32xf32>
    %143 = vector.shape_cast %142 : vector<1x64x32xf32> to vector<64x32xf32>
    %cst_68 = arith.constant dense<0.000000e+00> : vector<16x32xf32>
    %144 = tpu.matmul %141, %143, %cst_68 {dimension_numbers = #tpu.dot_dimension_numbers<[1], [0], [0], [1], [0, 0, 1, 1], [], []>} : vector<16x64xf32>, vector<64x32xf32>, vector<16x32xf32> -> vector<16x32xf32>
    %c0_69 = arith.constant 0 : index
    %c0_70 = arith.constant 0 : index
    %c0_71 = arith.constant 0 : index
    %145 = vector.load %arg15[%c0_69, %c0_70, %c0_71] : memref<2x1x32xf32, #tpu.memory_space<vmem>>, vector<1x1x32xf32>
    %146 = vector.shape_cast %145 : vector<1x1x32xf32> to vector<1x32xf32>
    %147 = vector.broadcast %146 : vector<1x32xf32> to vector<16x32xf32>
    %148 = arith.addf %144, %147 : vector<16x32xf32>
    %149 = arith.addf %121, %148 : vector<16x32xf32>
    %c0_72 = arith.constant 0 : index
    %c0_73 = arith.constant 0 : index
    %c0_74 = arith.constant 0 : index
    %150 = vector.load %arg16[%c0_72, %c0_73, %c0_74] : memref<2x1x32xf32, #tpu.memory_space<vmem>>, vector<1x1x32xf32>
    %151 = vector.shape_cast %150 : vector<1x1x32xf32> to vector<1x32xf32>
    %c0_75 = arith.constant 0 : index
    %c0_76 = arith.constant 0 : index
    %c0_77 = arith.constant 0 : index
    %152 = vector.load %arg17[%c0_75, %c0_76, %c0_77] : memref<2x1x32xf32, #tpu.memory_space<vmem>>, vector<1x1x32xf32>
    %153 = vector.shape_cast %152 : vector<1x1x32xf32> to vector<1x32xf32>
    %cst_78 = arith.constant dense<0.000000e+00> : vector<16xf32>
    %154 = vector.multi_reduction <add>, %149, %cst_78 [1] : vector<16x32xf32> to vector<16xf32>
    %155 = vector.shape_cast %154 : vector<16xf32> to vector<16x1xf32>
    %cst_79 = arith.constant 3.200000e+01 : f32
    %156 = vector.broadcast %cst_79 : f32 to vector<16x1xf32>
    %157 = arith.divf %155, %156 : vector<16x1xf32>
    %158 = vector.broadcast %157 : vector<16x1xf32> to vector<16x32xf32>
    %159 = arith.subf %149, %158 : vector<16x32xf32>
    %160 = arith.mulf %159, %159 : vector<16x32xf32>
    %cst_80 = arith.constant dense<0.000000e+00> : vector<16xf32>
    %161 = vector.multi_reduction <add>, %160, %cst_80 [1] : vector<16x32xf32> to vector<16xf32>
    %162 = vector.shape_cast %161 : vector<16xf32> to vector<16x1xf32>
    %cst_81 = arith.constant 3.200000e+01 : f32
    %163 = vector.broadcast %cst_81 : f32 to vector<16x1xf32>
    %164 = arith.divf %162, %163 : vector<16x1xf32>
    %165 = vector.broadcast %157 : vector<16x1xf32> to vector<16x32xf32>
    %166 = arith.subf %149, %165 : vector<16x32xf32>
    %cst_82 = arith.constant 9.99999996E-13 : f32
    %167 = vector.broadcast %cst_82 : f32 to vector<16x1xf32>
    %168 = arith.addf %164, %167 : vector<16x1xf32>
    %169 = math.rsqrt %168 : vector<16x1xf32>
    %170 = vector.broadcast %169 : vector<16x1xf32> to vector<16x32xf32>
    %171 = arith.mulf %166, %170 : vector<16x32xf32>
    %172 = vector.broadcast %151 : vector<1x32xf32> to vector<16x32xf32>
    %173 = arith.mulf %171, %172 : vector<16x32xf32>
    %174 = vector.broadcast %153 : vector<1x32xf32> to vector<16x32xf32>
    %175 = arith.addf %173, %174 : vector<16x32xf32>
    %c1 = arith.constant 1 : index
    %c0_83 = arith.constant 0 : index
    %c0_84 = arith.constant 0 : index
    %176 = vector.load %arg6[%c1, %c0_83, %c0_84] : memref<2x32x96xf32, #tpu.memory_space<vmem>>, vector<1x32x96xf32>
    %177 = vector.shape_cast %176 : vector<1x32x96xf32> to vector<32x96xf32>
    %cst_85 = arith.constant dense<0.000000e+00> : vector<16x96xf32>
    %178 = tpu.matmul %175, %177, %cst_85 {dimension_numbers = #tpu.dot_dimension_numbers<[1], [0], [0], [1], [0, 0, 1, 1], [], []>} : vector<16x32xf32>, vector<32x96xf32>, vector<16x96xf32> -> vector<16x96xf32>
    %c1_86 = arith.constant 1 : index
    %c0_87 = arith.constant 0 : index
    %c0_88 = arith.constant 0 : index
    %179 = vector.load %arg7[%c1_86, %c0_87, %c0_88] : memref<2x1x96xf32, #tpu.memory_space<vmem>>, vector<1x1x96xf32>
    %180 = vector.shape_cast %179 : vector<1x1x96xf32> to vector<1x96xf32>
    %181 = vector.broadcast %180 : vector<1x96xf32> to vector<16x96xf32>
    %182 = arith.addf %178, %181 : vector<16x96xf32>
    %c1_89 = arith.constant 1 : index
    %c0_90 = arith.constant 0 : index
    %c0_91 = arith.constant 0 : index
    %183 = vector.load %arg8[%c1_89, %c0_90, %c0_91] : memref<2x32x32xf32, #tpu.memory_space<vmem>>, vector<1x32x32xf32>
    %184 = vector.shape_cast %183 : vector<1x32x32xf32> to vector<32x32xf32>
    %cst_92 = arith.constant 0.000000e+00 : f32
    %185 = vector.broadcast %cst_92 : f32 to vector<16x32xf32>
    %186 = vector.extract_strided_slice %182 {offsets = [0, 0], sizes = [16, 16], strides = [1, 1]} : vector<16x96xf32> to vector<16x16xf32>
    %cst_93 = arith.constant 2.500000e-01 : f32
    %187 = vector.broadcast %cst_93 : f32 to vector<16x16xf32>
    %188 = arith.mulf %186, %187 : vector<16x16xf32>
    %189 = vector.extract_strided_slice %182 {offsets = [0, 32], sizes = [16, 16], strides = [1, 1]} : vector<16x96xf32> to vector<16x16xf32>
    %190 = vector.extract_strided_slice %182 {offsets = [0, 64], sizes = [16, 16], strides = [1, 1]} : vector<16x96xf32> to vector<16x16xf32>
    %cst_94 = arith.constant dense<0.000000e+00> : vector<16x16xf32>
    %191 = tpu.matmul %188, %189, %cst_94 {dimension_numbers = #tpu.dot_dimension_numbers<[1], [1], [0], [0], [0, 0, 1, 0], [], []>} : vector<16x16xf32>, vector<16x16xf32>, vector<16x16xf32> -> vector<16x16xf32>
    %192 = arith.addf %191, %13 : vector<16x16xf32>
    %cst_95 = arith.constant dense<0xFF800000> : vector<16xf32>
    %193 = vector.multi_reduction <maximumf>, %192, %cst_95 [1] : vector<16x16xf32> to vector<16xf32>
    %194 = vector.shape_cast %193 : vector<16xf32> to vector<16x1xf32>
    %195 = vector.broadcast %194 : vector<16x1xf32> to vector<16x16xf32>
    %196 = arith.subf %192, %195 : vector<16x16xf32>
    %197 = math.exp %196 : vector<16x16xf32>
    %cst_96 = arith.constant dense<0.000000e+00> : vector<16xf32>
    %198 = vector.multi_reduction <add>, %197, %cst_96 [1] : vector<16x16xf32> to vector<16xf32>
    %199 = vector.shape_cast %198 : vector<16xf32> to vector<16x1xf32>
    %200 = tpu.reciprocal %199 {approx = true} : vector<16x1xf32> -> vector<16x1xf32>
    %201 = vector.broadcast %200 : vector<16x1xf32> to vector<16x16xf32>
    %202 = arith.mulf %197, %201 : vector<16x16xf32>
    %cst_97 = arith.constant dense<0.000000e+00> : vector<16x16xf32>
    %203 = tpu.matmul %202, %190, %cst_97 {dimension_numbers = #tpu.dot_dimension_numbers<[1], [0], [0], [1], [0, 0, 1, 1], [], []>} : vector<16x16xf32>, vector<16x16xf32>, vector<16x16xf32> -> vector<16x16xf32>
    %204 = vector.extract_strided_slice %184 {offsets = [0, 0], sizes = [16, 32], strides = [1, 1]} : vector<32x32xf32> to vector<16x32xf32>
    %cst_98 = arith.constant dense<0.000000e+00> : vector<16x32xf32>
    %205 = tpu.matmul %203, %204, %cst_98 {dimension_numbers = #tpu.dot_dimension_numbers<[1], [0], [0], [1], [0, 0, 1, 1], [], []>} : vector<16x16xf32>, vector<16x32xf32>, vector<16x32xf32> -> vector<16x32xf32>
    %206 = arith.addf %185, %205 : vector<16x32xf32>
    %207 = vector.extract_strided_slice %182 {offsets = [0, 16], sizes = [16, 16], strides = [1, 1]} : vector<16x96xf32> to vector<16x16xf32>
    %cst_99 = arith.constant 2.500000e-01 : f32
    %208 = vector.broadcast %cst_99 : f32 to vector<16x16xf32>
    %209 = arith.mulf %207, %208 : vector<16x16xf32>
    %210 = vector.extract_strided_slice %182 {offsets = [0, 48], sizes = [16, 16], strides = [1, 1]} : vector<16x96xf32> to vector<16x16xf32>
    %211 = vector.extract_strided_slice %182 {offsets = [0, 80], sizes = [16, 16], strides = [1, 1]} : vector<16x96xf32> to vector<16x16xf32>
    %cst_100 = arith.constant dense<0.000000e+00> : vector<16x16xf32>
    %212 = tpu.matmul %209, %210, %cst_100 {dimension_numbers = #tpu.dot_dimension_numbers<[1], [1], [0], [0], [0, 0, 1, 0], [], []>} : vector<16x16xf32>, vector<16x16xf32>, vector<16x16xf32> -> vector<16x16xf32>
    %213 = arith.addf %212, %13 : vector<16x16xf32>
    %cst_101 = arith.constant dense<0xFF800000> : vector<16xf32>
    %214 = vector.multi_reduction <maximumf>, %213, %cst_101 [1] : vector<16x16xf32> to vector<16xf32>
    %215 = vector.shape_cast %214 : vector<16xf32> to vector<16x1xf32>
    %216 = vector.broadcast %215 : vector<16x1xf32> to vector<16x16xf32>
    %217 = arith.subf %213, %216 : vector<16x16xf32>
    %218 = math.exp %217 : vector<16x16xf32>
    %cst_102 = arith.constant dense<0.000000e+00> : vector<16xf32>
    %219 = vector.multi_reduction <add>, %218, %cst_102 [1] : vector<16x16xf32> to vector<16xf32>
    %220 = vector.shape_cast %219 : vector<16xf32> to vector<16x1xf32>
    %221 = tpu.reciprocal %220 {approx = true} : vector<16x1xf32> -> vector<16x1xf32>
    %222 = vector.broadcast %221 : vector<16x1xf32> to vector<16x16xf32>
    %223 = arith.mulf %218, %222 : vector<16x16xf32>
    %cst_103 = arith.constant dense<0.000000e+00> : vector<16x16xf32>
    %224 = tpu.matmul %223, %211, %cst_103 {dimension_numbers = #tpu.dot_dimension_numbers<[1], [0], [0], [1], [0, 0, 1, 1], [], []>} : vector<16x16xf32>, vector<16x16xf32>, vector<16x16xf32> -> vector<16x16xf32>
    %225 = vector.extract_strided_slice %184 {offsets = [16, 0], sizes = [16, 32], strides = [1, 1]} : vector<32x32xf32> to vector<16x32xf32>
    %cst_104 = arith.constant dense<0.000000e+00> : vector<16x32xf32>
    %226 = tpu.matmul %224, %225, %cst_104 {dimension_numbers = #tpu.dot_dimension_numbers<[1], [0], [0], [1], [0, 0, 1, 1], [], []>} : vector<16x16xf32>, vector<16x32xf32>, vector<16x32xf32> -> vector<16x32xf32>
    %227 = arith.addf %206, %226 : vector<16x32xf32>
    %c1_105 = arith.constant 1 : index
    %c0_106 = arith.constant 0 : index
    %c0_107 = arith.constant 0 : index
    %228 = vector.load %arg9[%c1_105, %c0_106, %c0_107] : memref<2x1x32xf32, #tpu.memory_space<vmem>>, vector<1x1x32xf32>
    %229 = vector.shape_cast %228 : vector<1x1x32xf32> to vector<1x32xf32>
    %230 = vector.broadcast %229 : vector<1x32xf32> to vector<16x32xf32>
    %231 = arith.addf %227, %230 : vector<16x32xf32>
    %232 = arith.addf %175, %231 : vector<16x32xf32>
    %c1_108 = arith.constant 1 : index
    %c0_109 = arith.constant 0 : index
    %c0_110 = arith.constant 0 : index
    %233 = vector.load %arg10[%c1_108, %c0_109, %c0_110] : memref<2x1x32xf32, #tpu.memory_space<vmem>>, vector<1x1x32xf32>
    %234 = vector.shape_cast %233 : vector<1x1x32xf32> to vector<1x32xf32>
    %c1_111 = arith.constant 1 : index
    %c0_112 = arith.constant 0 : index
    %c0_113 = arith.constant 0 : index
    %235 = vector.load %arg11[%c1_111, %c0_112, %c0_113] : memref<2x1x32xf32, #tpu.memory_space<vmem>>, vector<1x1x32xf32>
    %236 = vector.shape_cast %235 : vector<1x1x32xf32> to vector<1x32xf32>
    %cst_114 = arith.constant dense<0.000000e+00> : vector<16xf32>
    %237 = vector.multi_reduction <add>, %232, %cst_114 [1] : vector<16x32xf32> to vector<16xf32>
    %238 = vector.shape_cast %237 : vector<16xf32> to vector<16x1xf32>
    %cst_115 = arith.constant 3.200000e+01 : f32
    %239 = vector.broadcast %cst_115 : f32 to vector<16x1xf32>
    %240 = arith.divf %238, %239 : vector<16x1xf32>
    %241 = vector.broadcast %240 : vector<16x1xf32> to vector<16x32xf32>
    %242 = arith.subf %232, %241 : vector<16x32xf32>
    %243 = arith.mulf %242, %242 : vector<16x32xf32>
    %cst_116 = arith.constant dense<0.000000e+00> : vector<16xf32>
    %244 = vector.multi_reduction <add>, %243, %cst_116 [1] : vector<16x32xf32> to vector<16xf32>
    %245 = vector.shape_cast %244 : vector<16xf32> to vector<16x1xf32>
    %cst_117 = arith.constant 3.200000e+01 : f32
    %246 = vector.broadcast %cst_117 : f32 to vector<16x1xf32>
    %247 = arith.divf %245, %246 : vector<16x1xf32>
    %248 = vector.broadcast %240 : vector<16x1xf32> to vector<16x32xf32>
    %249 = arith.subf %232, %248 : vector<16x32xf32>
    %cst_118 = arith.constant 9.99999996E-13 : f32
    %250 = vector.broadcast %cst_118 : f32 to vector<16x1xf32>
    %251 = arith.addf %247, %250 : vector<16x1xf32>
    %252 = math.rsqrt %251 : vector<16x1xf32>
    %253 = vector.broadcast %252 : vector<16x1xf32> to vector<16x32xf32>
    %254 = arith.mulf %249, %253 : vector<16x32xf32>
    %255 = vector.broadcast %234 : vector<1x32xf32> to vector<16x32xf32>
    %256 = arith.mulf %254, %255 : vector<16x32xf32>
    %257 = vector.broadcast %236 : vector<1x32xf32> to vector<16x32xf32>
    %258 = arith.addf %256, %257 : vector<16x32xf32>
    %c1_119 = arith.constant 1 : index
    %c0_120 = arith.constant 0 : index
    %c0_121 = arith.constant 0 : index
    %259 = vector.load %arg12[%c1_119, %c0_120, %c0_121] : memref<2x32x64xf32, #tpu.memory_space<vmem>>, vector<1x32x64xf32>
    %260 = vector.shape_cast %259 : vector<1x32x64xf32> to vector<32x64xf32>
    %cst_122 = arith.constant dense<0.000000e+00> : vector<16x64xf32>
    %261 = tpu.matmul %258, %260, %cst_122 {dimension_numbers = #tpu.dot_dimension_numbers<[1], [0], [0], [1], [0, 0, 1, 1], [], []>} : vector<16x32xf32>, vector<32x64xf32>, vector<16x64xf32> -> vector<16x64xf32>
    %c1_123 = arith.constant 1 : index
    %c0_124 = arith.constant 0 : index
    %c0_125 = arith.constant 0 : index
    %262 = vector.load %arg13[%c1_123, %c0_124, %c0_125] : memref<2x1x64xf32, #tpu.memory_space<vmem>>, vector<1x1x64xf32>
    %263 = vector.shape_cast %262 : vector<1x1x64xf32> to vector<1x64xf32>
    %264 = vector.broadcast %263 : vector<1x64xf32> to vector<16x64xf32>
    %265 = arith.addf %261, %264 : vector<16x64xf32>
    %266 = arith.mulf %265, %265 : vector<16x64xf32>
    %267 = arith.mulf %265, %266 : vector<16x64xf32>
    %cst_126 = arith.constant 4.471500e-02 : f32
    %268 = vector.broadcast %cst_126 : f32 to vector<16x64xf32>
    %269 = arith.mulf %268, %267 : vector<16x64xf32>
    %270 = arith.addf %265, %269 : vector<16x64xf32>
    %cst_127 = arith.constant 0.797884583 : f32
    %271 = vector.broadcast %cst_127 : f32 to vector<16x64xf32>
    %272 = arith.mulf %271, %270 : vector<16x64xf32>
    %273 = math.tanh %272 : vector<16x64xf32>
    %cst_128 = arith.constant 1.000000e+00 : f32
    %274 = vector.broadcast %cst_128 : f32 to vector<16x64xf32>
    %275 = arith.addf %274, %273 : vector<16x64xf32>
    %cst_129 = arith.constant 5.000000e-01 : f32
    %276 = vector.broadcast %cst_129 : f32 to vector<16x64xf32>
    %277 = arith.mulf %276, %275 : vector<16x64xf32>
    %278 = arith.mulf %265, %277 : vector<16x64xf32>
    %c1_130 = arith.constant 1 : index
    %c0_131 = arith.constant 0 : index
    %c0_132 = arith.constant 0 : index
    %279 = vector.load %arg14[%c1_130, %c0_131, %c0_132] : memref<2x64x32xf32, #tpu.memory_space<vmem>>, vector<1x64x32xf32>
    %280 = vector.shape_cast %279 : vector<1x64x32xf32> to vector<64x32xf32>
    %cst_133 = arith.constant dense<0.000000e+00> : vector<16x32xf32>
    %281 = tpu.matmul %278, %280, %cst_133 {dimension_numbers = #tpu.dot_dimension_numbers<[1], [0], [0], [1], [0, 0, 1, 1], [], []>} : vector<16x64xf32>, vector<64x32xf32>, vector<16x32xf32> -> vector<16x32xf32>
    %c1_134 = arith.constant 1 : index
    %c0_135 = arith.constant 0 : index
    %c0_136 = arith.constant 0 : index
    %282 = vector.load %arg15[%c1_134, %c0_135, %c0_136] : memref<2x1x32xf32, #tpu.memory_space<vmem>>, vector<1x1x32xf32>
    %283 = vector.shape_cast %282 : vector<1x1x32xf32> to vector<1x32xf32>
    %284 = vector.broadcast %283 : vector<1x32xf32> to vector<16x32xf32>
    %285 = arith.addf %281, %284 : vector<16x32xf32>
    %286 = arith.addf %258, %285 : vector<16x32xf32>
    %c1_137 = arith.constant 1 : index
    %c0_138 = arith.constant 0 : index
    %c0_139 = arith.constant 0 : index
    %287 = vector.load %arg16[%c1_137, %c0_138, %c0_139] : memref<2x1x32xf32, #tpu.memory_space<vmem>>, vector<1x1x32xf32>
    %288 = vector.shape_cast %287 : vector<1x1x32xf32> to vector<1x32xf32>
    %c1_140 = arith.constant 1 : index
    %c0_141 = arith.constant 0 : index
    %c0_142 = arith.constant 0 : index
    %289 = vector.load %arg17[%c1_140, %c0_141, %c0_142] : memref<2x1x32xf32, #tpu.memory_space<vmem>>, vector<1x1x32xf32>
    %290 = vector.shape_cast %289 : vector<1x1x32xf32> to vector<1x32xf32>
    %cst_143 = arith.constant dense<0.000000e+00> : vector<16xf32>
    %291 = vector.multi_reduction <add>, %286, %cst_143 [1] : vector<16x32xf32> to vector<16xf32>
    %292 = vector.shape_cast %291 : vector<16xf32> to vector<16x1xf32>
    %cst_144 = arith.constant 3.200000e+01 : f32
    %293 = vector.broadcast %cst_144 : f32 to vector<16x1xf32>
    %294 = arith.divf %292, %293 : vector<16x1xf32>
    %295 = vector.broadcast %294 : vector<16x1xf32> to vector<16x32xf32>
    %296 = arith.subf %286, %295 : vector<16x32xf32>
    %297 = arith.mulf %296, %296 : vector<16x32xf32>
    %cst_145 = arith.constant dense<0.000000e+00> : vector<16xf32>
    %298 = vector.multi_reduction <add>, %297, %cst_145 [1] : vector<16x32xf32> to vector<16xf32>
    %299 = vector.shape_cast %298 : vector<16xf32> to vector<16x1xf32>
    %cst_146 = arith.constant 3.200000e+01 : f32
    %300 = vector.broadcast %cst_146 : f32 to vector<16x1xf32>
    %301 = arith.divf %299, %300 : vector<16x1xf32>
    %302 = vector.broadcast %294 : vector<16x1xf32> to vector<16x32xf32>
    %303 = arith.subf %286, %302 : vector<16x32xf32>
    %cst_147 = arith.constant 9.99999996E-13 : f32
    %304 = vector.broadcast %cst_147 : f32 to vector<16x1xf32>
    %305 = arith.addf %301, %304 : vector<16x1xf32>
    %306 = math.rsqrt %305 : vector<16x1xf32>
    %307 = vector.broadcast %306 : vector<16x1xf32> to vector<16x32xf32>
    %308 = arith.mulf %303, %307 : vector<16x32xf32>
    %309 = vector.broadcast %288 : vector<1x32xf32> to vector<16x32xf32>
    %310 = arith.mulf %308, %309 : vector<16x32xf32>
    %311 = vector.broadcast %290 : vector<1x32xf32> to vector<16x32xf32>
    %312 = arith.addf %310, %311 : vector<16x32xf32>
    %c0_148 = arith.constant 0 : index
    %c0_149 = arith.constant 0 : index
    %313 = vector.load %arg18[%c0_148, %c0_149] : memref<32x32xf32, #tpu.memory_space<vmem>>, vector<32x32xf32>
    %cst_150 = arith.constant dense<0.000000e+00> : vector<16x32xf32>
    %314 = tpu.matmul %312, %313, %cst_150 {dimension_numbers = #tpu.dot_dimension_numbers<[1], [0], [0], [1], [0, 0, 1, 1], [], []>} : vector<16x32xf32>, vector<32x32xf32>, vector<16x32xf32> -> vector<16x32xf32>
    %c0_151 = arith.constant 0 : index
    %c0_152 = arith.constant 0 : index
    %315 = vector.load %arg19[%c0_151, %c0_152] : memref<1x32xf32, #tpu.memory_space<vmem>>, vector<1x32xf32>
    %316 = vector.broadcast %315 : vector<1x32xf32> to vector<16x32xf32>
    %317 = arith.addf %314, %316 : vector<16x32xf32>
    %318 = math.tanh %317 : vector<16x32xf32>
    %c0_153 = arith.constant 0 : index
    %c0_154 = arith.constant 0 : index
    %319 = vector.load %arg24[%c0_153, %c0_154] : memref<32x2xf32, #tpu.memory_space<vmem>>, vector<32x2xf32>
    %cst_155 = arith.constant dense<0.000000e+00> : vector<16x2xf32>
    %320 = tpu.matmul %318, %319, %cst_155 {dimension_numbers = #tpu.dot_dimension_numbers<[1], [0], [0], [1], [0, 0, 1, 1], [], []>} : vector<16x32xf32>, vector<32x2xf32>, vector<16x2xf32> -> vector<16x2xf32>
    %c0_156 = arith.constant 0 : index
    %c0_157 = arith.constant 0 : index
    %321 = vector.load %arg25[%c0_156, %c0_157] : memref<1x2xf32, #tpu.memory_space<vmem>>, vector<1x2xf32>
    %322 = vector.broadcast %321 : vector<1x2xf32> to vector<16x2xf32>
    %323 = arith.addf %320, %322 : vector<16x2xf32>
    %c0_158 = arith.constant 0 : index
    %c0_159 = arith.constant 0 : index
    %324 = vector.load %arg26[%c0_158, %c0_159] : memref<16x2xf32, #tpu.memory_space<vmem>>, vector<16x2xf32>
    tpu.vector_store %arg26[%c0_158, %c0_159], %323 {strides = array<i32>} : memref<16x2xf32, #tpu.memory_space<vmem>>, vector<16x2xf32>,
    return
  }
}

</mosaic_0001>

<llo_original>
// kernel: my_bert_model_forward.1
$region0: #{my_bert_model_forward.1}
  #allocation0 [shape = 'u32[]', space=smem, size = 0x4, offset = 0x4, fixed_abs, tag = 'smem constant byte address 0x4 - core index']
  #allocation1 [shape = 'u32[72,128]{1,0:T(1,128)}', space=vmem, size = 0x9000, scoped, tag = 'internal scratch']
  #allocation2 [shape = 'f32[1,1]{1,0:T(1,128)S(1)}', space=vmem, size = 0x200, scoped, tag = 'scoped memory for my_bert_model_forward.1']
  %s0 = inlined_call_operand.vmem [shape: f32[16,32], index: 0, kind: input, shape index: {}]
  %s1 = inlined_call_operand.vmem [shape: f32[16,1], index: 1, kind: input, shape index: {}]
  %s2 = inlined_call_operand.vmem [shape: f32[1,16], index: 2, kind: input, shape index: {}]
  %s3 = inlined_call_operand.vmem [shape: f32[1,16], index: 3, kind: input, shape index: {}]
  %s4 = inlined_call_operand.vmem [shape: f32[1,32], index: 4, kind: input, shape index: {}]
  %s5 = inlined_call_operand.vmem [shape: f32[1,32], index: 5, kind: input, shape index: {}]
  %s6 = inlined_call_operand.vmem [shape: f32[2,32,96], index: 6, kind: input, shape index: {}]
  %s7 = inlined_call_operand.vmem [shape: f32[2,1,96], index: 7, kind: input, shape index: {}]
  %s8 = inlined_call_operand.vmem [shape: f32[2,32,32], index: 8, kind: input, shape index: {}]
  %s9 = inlined_call_operand.vmem [shape: f32[2,1,32], index: 9, kind: input, shape index: {}]
  %s10 = inlined_call_operand.vmem [shape: f32[2,1,32], index: 10, kind: input, shape index: {}]
  %s11 = inlined_call_operand.vmem [shape: f32[2,1,32], index: 11, kind: input, shape index: {}]
  %s12 = inlined_call_operand.vmem [shape: f32[2,32,64], index: 12, kind: input, shape index: {}]
  %s13 = inlined_call_operand.vmem [shape: f32[2,1,64], index: 13, kind: input, shape index: {}]
  %s14 = inlined_call_operand.vmem [shape: f32[2,64,32], index: 14, kind: input, shape index: {}]
  %s15 = inlined_call_operand.vmem [shape: f32[2,1,32], index: 15, kind: input, shape index: {}]
  %s16 = inlined_call_operand.vmem [shape: f32[2,1,32], index: 16, kind: input, shape index: {}]
  %s17 = inlined_call_operand.vmem [shape: f32[2,1,32], index: 17, kind: input, shape index: {}]
  %s18 = inlined_call_operand.vmem [shape: f32[32,32], index: 18, kind: input, shape index: {}]
  %s19 = inlined_call_operand.vmem [shape: f32[1,32], index: 19, kind: input, shape index: {}]
  %s20 = inlined_call_operand.vmem [shape: f32[32,1], index: 20, kind: input, shape index: {}]
  %s21 = inlined_call_operand.<no memory space> [shape: f32[1,1], index: 21, kind: input, shape index: {}]
  %s22 = inlined_call_operand.vmem [shape: f32[32,32], index: 22, kind: input, shape index: {}]
  %s23 = inlined_call_operand.vmem [shape: f32[1,32], index: 23, kind: input, shape index: {}]
  %s24 = inlined_call_operand.vmem [shape: f32[32,2], index: 24, kind: input, shape index: {}]
  %s25 = inlined_call_operand.vmem [shape: f32[1,2], index: 25, kind: input, shape index: {}]
  %s26 = inlined_call_operand.vmem [shape: f32[16,2], index: 26, kind: output, shape index: {}]
  %s27 = sld [smem:[#allocation0]]
  $region114: #{my_bert_model_forward.1} parent=0
    _
  %s29 = ssub.s32 1, %s27
  %s30 = scalar_select 0, %s29, %s27
  %v31 = vstv %s21
  %32 = vst [vmem:[#allocation2] sm:$0x1] %v31
  // Predicated region
  $region2: #{my_bert_model_forward.1} parent=0 // pred_check
    _
  $region3: #{my_bert_model_forward.1} parent=0 // pred_check_branch
    %34 = sbr.rel (0) target = $region5
  $region4: #{my_bert_model_forward.1} parent=0 // pred_region
    _
  $region5: #{my_bert_model_forward.1} parent=0 // pred_fallthru
    _
  // Predicated region
  $region6: #{my_bert_model_forward.1} parent=0 // pred_check
    _
  $region7: #{my_bert_model_forward.1} parent=0 // pred_check_branch
    %36 = sbr.rel (0) target = $region9
  $region8: #{my_bert_model_forward.1} parent=0 // pred_region
    _
  $region9: #{my_bert_model_forward.1} parent=0 // pred_fallthru
    _
  // Predicated region
  $region10: #{my_bert_model_forward.1} parent=0 // pred_check
    _
  $region11: #{my_bert_model_forward.1} parent=0 // pred_check_branch
    %38 = sbr.rel (0) target = $region13
  $region12: #{my_bert_model_forward.1} parent=0 // pred_region
    _
  $region13: #{my_bert_model_forward.1} parent=0 // pred_fallthru
    _
  // Predicated region
  $region14: #{my_bert_model_forward.1} parent=0 // pred_check
    _
  $region15: #{my_bert_model_forward.1} parent=0 // pred_check_branch
    %40 = sbr.rel (0) target = $region17
  $region16: #{my_bert_model_forward.1} parent=0 // pred_region
    _
  $region17: #{my_bert_model_forward.1} parent=0 // pred_fallthru
    _
  // Predicated region
  $region18: #{my_bert_model_forward.1} parent=0 // pred_check
    _
  $region19: #{my_bert_model_forward.1} parent=0 // pred_check_branch
    %42 = sbr.rel (0) target = $region21
  $region20: #{my_bert_model_forward.1} parent=0 // pred_region
    _
  $region21: #{my_bert_model_forward.1} parent=0 // pred_fallthru
    _
  // Predicated region
  $region22: #{my_bert_model_forward.1} parent=0 // pred_check
    _
  $region23: #{my_bert_model_forward.1} parent=0 // pred_check_branch
    %44 = sbr.rel (0) target = $region25
  $region24: #{my_bert_model_forward.1} parent=0 // pred_region
    _
  $region25: #{my_bert_model_forward.1} parent=0 // pred_fallthru
    _
  // Predicated region
  $region26: #{my_bert_model_forward.1} parent=0 // pred_check
    _
  $region27: #{my_bert_model_forward.1} parent=0 // pred_check_branch
    %46 = sbr.rel (0) target = $region29
  $region28: #{my_bert_model_forward.1} parent=0 // pred_region
    _
  $region29: #{my_bert_model_forward.1} parent=0 // pred_fallthru
    _
  // Predicated region
  $region30: #{my_bert_model_forward.1} parent=0 // pred_check
    _
  $region31: #{my_bert_model_forward.1} parent=0 // pred_check_branch
    %48 = sbr.rel (0) target = $region33
  $region32: #{my_bert_model_forward.1} parent=0 // pred_region
    _
  $region33: #{my_bert_model_forward.1} parent=0 // pred_fallthru
    _
  // Predicated region
  $region34: #{my_bert_model_forward.1} parent=0 // pred_check
    _
  $region35: #{my_bert_model_forward.1} parent=0 // pred_check_branch
    %50 = sbr.rel (0) target = $region37
  $region36: #{my_bert_model_forward.1} parent=0 // pred_region
    _
  $region37: #{my_bert_model_forward.1} parent=0 // pred_fallthru
    _
  // Predicated region
  $region38: #{my_bert_model_forward.1} parent=0 // pred_check
    _
  $region39: #{my_bert_model_forward.1} parent=0 // pred_check_branch
    %52 = sbr.rel (0) target = $region41
  $region40: #{my_bert_model_forward.1} parent=0 // pred_region
    _
  $region41: #{my_bert_model_forward.1} parent=0 // pred_fallthru
    _
  // Predicated region
  $region42: #{my_bert_model_forward.1} parent=0 // pred_check
    _
  $region43: #{my_bert_model_forward.1} parent=0 // pred_check_branch
    %54 = sbr.rel (0) target = $region45
  $region44: #{my_bert_model_forward.1} parent=0 // pred_region
    _
  $region45: #{my_bert_model_forward.1} parent=0 // pred_fallthru
    _
  // Predicated region
  $region46: #{my_bert_model_forward.1} parent=0 // pred_check
    _
  $region47: #{my_bert_model_forward.1} parent=0 // pred_check_branch
    %56 = sbr.rel (0) target = $region49
  $region48: #{my_bert_model_forward.1} parent=0 // pred_region
    _
  $region49: #{my_bert_model_forward.1} parent=0 // pred_fallthru
    _
  // Predicated region
  $region50: #{my_bert_model_forward.1} parent=0 // pred_check
    _
  $region51: #{my_bert_model_forward.1} parent=0 // pred_check_branch
    %58 = sbr.rel (0) target = $region53
  $region52: #{my_bert_model_forward.1} parent=0 // pred_region
    _
  $region53: #{my_bert_model_forward.1} parent=0 // pred_fallthru
    _
  // Predicated region
  $region54: #{my_bert_model_forward.1} parent=0 // pred_check
    _
  $region55: #{my_bert_model_forward.1} parent=0 // pred_check_branch
    %60 = sbr.rel (0) target = $region57
  $region56: #{my_bert_model_forward.1} parent=0 // pred_region
    _
  $region57: #{my_bert_model_forward.1} parent=0 // pred_fallthru
    _
  // Predicated region
  $region58: #{my_bert_model_forward.1} parent=0 // pred_check
    _
  $region59: #{my_bert_model_forward.1} parent=0 // pred_check_branch
    %62 = sbr.rel (0) target = $region61
  $region60: #{my_bert_model_forward.1} parent=0 // pred_region
    _
  $region61: #{my_bert_model_forward.1} parent=0 // pred_fallthru
    _
  // Predicated region
  $region62: #{my_bert_model_forward.1} parent=0 // pred_check
    _
  $region63: #{my_bert_model_forward.1} parent=0 // pred_check_branch
    %64 = sbr.rel (0) target = $region65
  $region64: #{my_bert_model_forward.1} parent=0 // pred_region
    _
  $region65: #{my_bert_model_forward.1} parent=0 // pred_fallthru
    _
  // Predicated region
  $region66: #{my_bert_model_forward.1} parent=0 // pred_check
    _
  $region67: #{my_bert_model_forward.1} parent=0 // pred_check_branch
    %66 = sbr.rel (0) target = $region69
  $region68: #{my_bert_model_forward.1} parent=0 // pred_region
    _
  $region69: #{my_bert_model_forward.1} parent=0 // pred_fallthru
    _
  // Predicated region
  $region70: #{my_bert_model_forward.1} parent=0 // pred_check
    _
  $region71: #{my_bert_model_forward.1} parent=0 // pred_check_branch
    %68 = sbr.rel (0) target = $region73
  $region72: #{my_bert_model_forward.1} parent=0 // pred_region
    _
  $region73: #{my_bert_model_forward.1} parent=0 // pred_fallthru
    _
  // Predicated region
  $region74: #{my_bert_model_forward.1} parent=0 // pred_check
    _
  $region75: #{my_bert_model_forward.1} parent=0 // pred_check_branch
    %70 = sbr.rel (0) target = $region77
  $region76: #{my_bert_model_forward.1} parent=0 // pred_region
    _
  $region77: #{my_bert_model_forward.1} parent=0 // pred_fallthru
    _
  // Predicated region
  $region78: #{my_bert_model_forward.1} parent=0 // pred_check
    _
  $region79: #{my_bert_model_forward.1} parent=0 // pred_check_branch
    %72 = sbr.rel (0) target = $region81
  $region80: #{my_bert_model_forward.1} parent=0 // pred_region
    _
  $region81: #{my_bert_model_forward.1} parent=0 // pred_fallthru
    _
  // Predicated region
  $region82: #{my_bert_model_forward.1} parent=0 // pred_check
    _
  $region83: #{my_bert_model_forward.1} parent=0 // pred_check_branch
    %74 = sbr.rel (0) target = $region85
  $region84: #{my_bert_model_forward.1} parent=0 // pred_region
    _
  $region85: #{my_bert_model_forward.1} parent=0 // pred_fallthru
    _
  // Predicated region
  $region86: #{my_bert_model_forward.1} parent=0 // pred_check
    _
  $region87: #{my_bert_model_forward.1} parent=0 // pred_check_branch
    %76 = sbr.rel (0) target = $region89
  $region88: #{my_bert_model_forward.1} parent=0 // pred_region
    _
  $region89: #{my_bert_model_forward.1} parent=0 // pred_fallthru
    _
  // Predicated region
  $region90: #{my_bert_model_forward.1} parent=0 // pred_check
    _
  $region91: #{my_bert_model_forward.1} parent=0 // pred_check_branch
    %78 = sbr.rel (0) target = $region93
  $region92: #{my_bert_model_forward.1} parent=0 // pred_region
    _
  $region93: #{my_bert_model_forward.1} parent=0 // pred_fallthru
    _
  // Predicated region
  $region94: #{my_bert_model_forward.1} parent=0 // pred_check
    _
  $region95: #{my_bert_model_forward.1} parent=0 // pred_check_branch
    %80 = sbr.rel (0) target = $region97
  $region96: #{my_bert_model_forward.1} parent=0 // pred_region
    _
  $region97: #{my_bert_model_forward.1} parent=0 // pred_fallthru
    _
  // Predicated region
  $region98: #{my_bert_model_forward.1} parent=0 // pred_check
    _
  $region99: #{my_bert_model_forward.1} parent=0 // pred_check_branch
    %82 = sbr.rel (0) target = $region101
  $region100: #{my_bert_model_forward.1} parent=0 // pred_region
    _
  $region101: #{my_bert_model_forward.1} parent=0 // pred_fallthru
    _
  // Predicated region
  $region102: #{my_bert_model_forward.1} parent=0 // pred_check
    _
  $region103: #{my_bert_model_forward.1} parent=0 // pred_check_branch
    %84 = sbr.rel (0) target = $region105
  $region104: #{my_bert_model_forward.1} parent=0 // pred_region
    _
  $region105: #{my_bert_model_forward.1} parent=0 // pred_fallthru
    _
  %v85 = vld [vmem:[%s1] sm:$0xff]
  %v86 = vld [vmem:[%s1 + $0x8] sm:$0xff]
  %v87 = vld [vmem:[%s2] sm:$0x1]
  %89 = vset.pattern.permute.xlu0 0
  %90 = vperm.xlu0 %89, %v85
  %v91 = vpop.permute.xlu0 %90
  %94 = vset.pattern.permute.xlu0 0
  %95 = vperm.xlu0 %94, %v86
  %v96 = vpop.permute.xlu0 %95
  %v99 = vperm.slane %v87, 0
  %vm101 = vcmp.eq.f32.partialorder %v91, %v99
  %vm102 = vcmp.eq.f32.partialorder %v96, %v99
  %v103 = vsel %vm101, 1, 0
  %v104 = vsel %vm102, 1, 0
  %v105 = vcvt.s32.f32 %v103
  %v106 = vcvt.s32.f32 %v104
  %v107 = vld [vmem:[%s3] sm:$0x1]
  %v109 = vperm.slane %v107, 0
  %v111 = vmul.f32 %v105, %v109
  %v112 = vmul.f32 %v106, %v109
  %v113 = vsub.f32 1.0, %v111
  %v114 = vsub.f32 1.0, %v112
  %v115 = vmul.f32 %v113, -10000.0
  %v116 = vmul.f32 %v114, -10000.0
  %v117 = vld [vmem:[%s0] sm:$0xff]
  %v118 = vld [vmem:[%s0 + $0x8] sm:$0xff]
  %v119 = vld [vmem:[%s4] sm:$0x1]
  %v120 = vld [vmem:[%s5] sm:$0x1]
  %vm121 = vcmask 261120
  %v122 = vsel %vm121, %v117, 0.0
  %123 = vadd.xlane.f32.xlu0 %v122
  %v124 = vpop.xlane.xlu0 %123
  %v125 = vsel %vm121, %v118, 0.0
  %126 = vadd.xlane.f32.xlu0 %v125
  %v127 = vpop.xlane.xlu0 %126
  %v128 = vrcp.pop 32.0
  %v129 = vmul.f32 32.0, %v128
  %v130 = vsub.f32 1.0, %v129
  %v131 = vmul.f32 %v128, %v130
  %v132 = vadd.f32 %v128, %v131
  %vm133 = vweird.f32 %v128
  %v134 = vsel %vm133, %v128, %v132
  %v135 = vmul.f32 %v124, %v134
  %v136 = vmul.f32 %v127, %v134
  %v137 = vsub.f32 %v117, %v135
  %v138 = vsub.f32 %v118, %v136
  %v139 = vmul.f32 %v137, %v137
  %v140 = vmul.f32 %v138, %v138
  %v141 = vsel %vm121, %v139, 0.0
  %142 = vadd.xlane.f32.xlu0 %v141
  %v143 = vpop.xlane.xlu0 %142
  %v144 = vsel %vm121, %v140, 0.0
  %145 = vadd.xlane.f32.xlu0 %v144
  %v146 = vpop.xlane.xlu0 %145
  %v147 = vmul.f32 %v143, %v134
  %v148 = vmul.f32 %v146, %v134
  %v149 = vadd.f32 %v147, 1e-12
  %v150 = vadd.f32 %v148, 1e-12
  %v151 = vrsqrt.pop %v149
  %v152 = vmul.f32 %v151, %v149
  %v153 = vmul.f32 %v152, %v151
  %v154 = vmul.f32 0.5, %v153
  %v155 = vsub.f32 1.5, %v154
  %v156 = vmul.f32 %v151, %v155
  %vm157 = vweird.f32 %v149
  %vm158 = vweird.f32 %v151
  %vm159 = vmor %vm157, %vm158
  %v160 = vsel %vm159, %v151, %v156
  %v161 = vrsqrt.pop %v150
  %v162 = vmul.f32 %v161, %v150
  %v163 = vmul.f32 %v162, %v161
  %v164 = vmul.f32 0.5, %v163
  %v165 = vsub.f32 1.5, %v164
  %v166 = vmul.f32 %v161, %v165
  %vm167 = vweird.f32 %v150
  %vm168 = vweird.f32 %v161
  %vm169 = vmor %vm167, %vm168
  %v170 = vsel %vm169, %v161, %v166
  %v171 = vmul.f32 %v137, %v160
  %v172 = vmul.f32 %v138, %v170
  %v174 = vperm.slane %v119, 0
  %v176 = vmul.f32 %v171, %v174
  %v177 = vmul.f32 %v172, %v174
  %v179 = vperm.slane %v120, 0
  %v181 = vadd.f32 %v176, %v179
  %v182 = vadd.f32 %v177, %v179
  %v183 = vld [vmem:[%s6] sm:$0xff]
  %v184 = vld [vmem:[%s6 + $0x8] sm:$0xff]
  %v185 = vld [vmem:[%s6 + $0x10] sm:$0xff]
  %v186 = vld [vmem:[%s6 + $0x18] sm:$0xff]
  %v187 = vld [vmem:[%s7] sm:$0x1]
  %v189 = vperm.slane %v187, 0
  %v192 = vsel %vm121, %v181, 0
  %v195 = vsel %vm121, %v182, 0
  %197 = vmatpush.msra.mxu0 0.0
  %198 = vmatpush.msra.mxu0 0.0
  %199 = vmatpush.msra.mxu0 0.0
  %200 = vmatpush.msra.mxu0 0.0
  %201 = vmatpush.msra.mxu0 0.0
  %202 = vmatpush.msra.mxu0 0.0
  %203 = vmatpush.msra.mxu0 0.0
  %204 = vmatpush.msra.mxu0 0.0
  %205 = vmatpush.msra.mxu0 0.0
  %206 = vmatpush.msra.mxu0 0.0
  %207 = vmatpush.msra.mxu0 0.0
  %208 = vmatpush.msra.mxu0 0.0
  %209 = vmatpush.msra.mxu0 %v186
  %210 = vmatpush.msra.mxu0 %v185
  %211 = vmatpush.msra.mxu0 %v184
  %212 = vmatpush.msra.mxu0 %v183
  %213 = vmatmul.f32.gmra.mxu0 %v192
  %v214 = vpop.f32.mrf.mxu0
  %v215 = vadd.f32 %v189, %v214
  %216 = vmatmul.f32.gmra.mxu0 %v195
  %v217 = vpop.f32.mrf.mxu0
  %v218 = vadd.f32 %v189, %v217
  %219 = vdwg.mxu0
  %v220 = vld [vmem:[%s8] sm:$0xff]
  %v221 = vld [vmem:[%s8 + $0x8] sm:$0xff]
  %v222 = vld [vmem:[%s8 + $0x10] sm:$0xff]
  %v223 = vld [vmem:[%s8 + $0x18] sm:$0xff]
  %v224 = vmul.f32 %v215, 0.25
  %v225 = vmul.f32 %v218, 0.25
  %228 = vrot.lane.b32.xlu0 %v215, 96
  %v229 = vpop.permute.xlu0 %228
  %230 = vrot.lane.b32.xlu0 %v218, 96
  %v231 = vpop.permute.xlu0 %230
  %vm232 = vcmask 130048
  %v234 = vsel %vm232, %v224, 0
  %v237 = vsel %vm232, %v225, 0
  %v239 = vsel %vm232, %v229, 0
  %v241 = vsel %vm232, %v231, 0
  %243 = vmatpush.xpose.msra.mxu0 0.0
  %244 = vmatpush.xpose.msra.mxu0 0.0
  %245 = vmatpush.xpose.msra.mxu0 0.0
  %246 = vmatpush.xpose.msra.mxu0 0.0
  %247 = vmatpush.xpose.msra.mxu0 0.0
  %248 = vmatpush.xpose.msra.mxu0 0.0
  %249 = vmatpush.xpose.msra.mxu0 0.0
  %250 = vmatpush.xpose.msra.mxu0 0.0
  %251 = vmatpush.xpose.msra.mxu0 0.0
  %252 = vmatpush.xpose.msra.mxu0 0.0
  %253 = vmatpush.xpose.msra.mxu0 0.0
  %254 = vmatpush.xpose.msra.mxu0 0.0
  %255 = vmatpush.xpose.msra.mxu0 0.0
  %256 = vmatpush.xpose.msra.mxu0 0.0
  %257 = vmatpush.xpose.msra.mxu0 %v241
  %258 = vmatpush.xpose.msra.mxu0 %v239
  %259 = vmatmul.f32.gmra.mxu0 %v234
  %v260 = vpop.f32.mrf.mxu0
  %v261 = vadd.f32 %v115, %v260
  %262 = vmatmul.f32.gmra.mxu0 %v237
  %v263 = vpop.f32.mrf.mxu0
  %v264 = vadd.f32 %v116, %v263
  %265 = vdwg.mxu0
  %v266 = vsel %vm232, %v261, -inf
  %267 = vmax.xlane.f32.xlu0 %v266
  %v268 = vpop.xlane.xlu0 %267
  %v269 = vsel %vm232, %v264, -inf
  %270 = vmax.xlane.f32.xlu0 %v269
  %v271 = vpop.xlane.xlu0 %270
  %v272 = vsub.f32 %v261, %v268
  %v273 = vsub.f32 %v264, %v271
  %v274 = vmul.f32 %v272, 1.442695
  %v275 = vpow.pop %v274
  %v276 = vmul.f32 %v273, 1.442695
  %v277 = vpow.pop %v276
  %v278 = vsel %vm232, %v275, 0.0
  %279 = vadd.xlane.f32.xlu0 %v278
  %v280 = vpop.xlane.xlu0 %279
  %v281 = vsel %vm232, %v277, 0.0
  %282 = vadd.xlane.f32.xlu0 %v281
  %v283 = vpop.xlane.xlu0 %282
  %v284 = vrcp.pop %v280
  %v285 = vrcp.pop %v283
  %v286 = vmul.f32 %v275, %v284
  %v287 = vmul.f32 %v277, %v285
  %288 = vrot.lane.b32.xlu0 %v215, 64
  %v289 = vpop.permute.xlu0 %288
  %290 = vrot.lane.b32.xlu0 %v218, 64
  %v291 = vpop.permute.xlu0 %290
  %v295 = vsel %vm232, %v286, 0
  %v298 = vsel %vm232, %v287, 0
  %300 = vmatpush.msra.mxu0 0.0
  %301 = vmatpush.msra.mxu0 0.0
  %302 = vmatpush.msra.mxu0 0.0
  %303 = vmatpush.msra.mxu0 0.0
  %304 = vmatpush.msra.mxu0 0.0
  %305 = vmatpush.msra.mxu0 0.0
  %306 = vmatpush.msra.mxu0 0.0
  %307 = vmatpush.msra.mxu0 0.0
  %308 = vmatpush.msra.mxu0 0.0
  %309 = vmatpush.msra.mxu0 0.0
  %310 = vmatpush.msra.mxu0 0.0
  %311 = vmatpush.msra.mxu0 0.0
  %312 = vmatpush.msra.mxu0 0.0
  %313 = vmatpush.msra.mxu0 0.0
  %314 = vmatpush.msra.mxu0 %v291
  %315 = vmatpush.msra.mxu0 %v289
  %316 = vmatmul.f32.gmra.mxu0 %v295
  %v317 = vpop.f32.mrf.mxu0
  %v318 = vadd.f32 0.0, %v317
  %319 = vmatmul.f32.gmra.mxu0 %v298
  %v320 = vpop.f32.mrf.mxu0
  %v321 = vadd.f32 0.0, %v320
  %322 = vdwg.mxu0
  %323 = vrot.lane.b32.xlu0 %v224, 112
  %v324 = vpop.permute.xlu0 %323
  %325 = vrot.lane.b32.xlu0 %v225, 112
  %v326 = vpop.permute.xlu0 %325
  %327 = vrot.lane.b32.xlu0 %v215, 80
  %v328 = vpop.permute.xlu0 %327
  %329 = vrot.lane.b32.xlu0 %v218, 80
  %v330 = vpop.permute.xlu0 %329
  %v331 = vsel %vm232, %v324, 0
  %v333 = vsel %vm232, %v326, 0
  %v335 = vsel %vm232, %v328, 0
  %v337 = vsel %vm232, %v330, 0
  %339 = vmatpush.xpose.msra.mxu0 0.0
  %340 = vmatpush.xpose.msra.mxu0 0.0
  %341 = vmatpush.xpose.msra.mxu0 0.0
  %342 = vmatpush.xpose.msra.mxu0 0.0
  %343 = vmatpush.xpose.msra.mxu0 0.0
  %344 = vmatpush.xpose.msra.mxu0 0.0
  %345 = vmatpush.xpose.msra.mxu0 0.0
  %346 = vmatpush.xpose.msra.mxu0 0.0
  %347 = vmatpush.xpose.msra.mxu0 0.0
  %348 = vmatpush.xpose.msra.mxu0 0.0
  %349 = vmatpush.xpose.msra.mxu0 0.0
  %350 = vmatpush.xpose.msra.mxu0 0.0
  %351 = vmatpush.xpose.msra.mxu0 0.0
  %352 = vmatpush.xpose.msra.mxu0 0.0
  %353 = vmatpush.xpose.msra.mxu0 %v337
  %354 = vmatpush.xpose.msra.mxu0 %v335
  %355 = vmatmul.f32.gmra.mxu0 %v331
  %v356 = vpop.f32.mrf.mxu0
  %v357 = vadd.f32 %v115, %v356
  %358 = vmatmul.f32.gmra.mxu0 %v333
  %v359 = vpop.f32.mrf.mxu0
  %v360 = vadd.f32 %v116, %v359
  %361 = vdwg.mxu0
  %v362 = vsel %vm232, %v357, -inf
  %363 = vmax.xlane.f32.xlu0 %v362
  %v364 = vpop.xlane.xlu0 %363
  %v365 = vsel %vm232, %v360, -inf
  %366 = vmax.xlane.f32.xlu0 %v365
  %v367 = vpop.xlane.xlu0 %366
  %v368 = vsub.f32 %v357, %v364
  %v369 = vsub.f32 %v360, %v367
  %v370 = vmul.f32 %v368, 1.442695
  %v371 = vpow.pop %v370
  %v372 = vmul.f32 %v369, 1.442695
  %v373 = vpow.pop %v372
  %v374 = vsel %vm232, %v371, 0.0
  %375 = vadd.xlane.f32.xlu0 %v374
  %v376 = vpop.xlane.xlu0 %375
  %v377 = vsel %vm232, %v373, 0.0
  %378 = vadd.xlane.f32.xlu0 %v377
  %v379 = vpop.xlane.xlu0 %378
  %v380 = vrcp.pop %v376
  %v381 = vrcp.pop %v379
  %v382 = vmul.f32 %v371, %v380
  %v383 = vmul.f32 %v373, %v381
  %384 = vrot.lane.b32.xlu0 %v215, 48
  %v385 = vpop.permute.xlu0 %384
  %386 = vrot.lane.b32.xlu0 %v218, 48
  %v387 = vpop.permute.xlu0 %386
  %v391 = vsel %vm232, %v382, 0
  %v394 = vsel %vm232, %v383, 0
  %396 = vmatpush.msra.mxu0 0.0
  %397 = vmatpush.msra.mxu0 0.0
  %398 = vmatpush.msra.mxu0 0.0
  %399 = vmatpush.msra.mxu0 0.0
  %400 = vmatpush.msra.mxu0 0.0
  %401 = vmatpush.msra.mxu0 0.0
  %402 = vmatpush.msra.mxu0 0.0
  %403 = vmatpush.msra.mxu0 0.0
  %404 = vmatpush.msra.mxu0 0.0
  %405 = vmatpush.msra.mxu0 0.0
  %406 = vmatpush.msra.mxu0 0.0
  %407 = vmatpush.msra.mxu0 0.0
  %408 = vmatpush.msra.mxu0 0.0
  %409 = vmatpush.msra.mxu0 0.0
  %410 = vmatpush.msra.mxu0 %v387
  %411 = vmatpush.msra.mxu0 %v385
  %412 = vmatmul.f32.gmra.mxu0 %v391
  %v413 = vpop.f32.mrf.mxu0
  %v414 = vadd.f32 0.0, %v413
  %415 = vmatmul.f32.gmra.mxu0 %v394
  %v416 = vpop.f32.mrf.mxu0
  %v417 = vadd.f32 0.0, %v416
  %418 = vdwg.mxu0
  %v420 = vsel %vm232, %v414, 0
  %v423 = vsel %vm232, %v417, 0
  %425 = vmatpush.msra.mxu0 0.0
  %426 = vmatpush.msra.mxu0 0.0
  %427 = vmatpush.msra.mxu0 0.0
  %428 = vmatpush.msra.mxu0 0.0
  %429 = vmatpush.msra.mxu0 0.0
  %430 = vmatpush.msra.mxu0 0.0
  %431 = vmatpush.msra.mxu0 0.0
  %432 = vmatpush.msra.mxu0 0.0
  %433 = vmatpush.msra.mxu0 0.0
  %434 = vmatpush.msra.mxu0 0.0
  %435 = vmatpush.msra.mxu0 0.0
  %436 = vmatpush.msra.mxu0 0.0
  %437 = vmatpush.msra.mxu0 0.0
  %438 = vmatpush.msra.mxu0 0.0
  %439 = vmatpush.msra.mxu0 %v223
  %440 = vmatpush.msra.mxu0 %v222
  %441 = vmatmul.f32.gmra.mxu0 %v420
  %v442 = vpop.f32.mrf.mxu0
  %v443 = vadd.f32 0.0, %v442
  %444 = vmatmul.f32.gmra.mxu0 %v423
  %v445 = vpop.f32.mrf.mxu0
  %v446 = vadd.f32 0.0, %v445
  %447 = vdwg.mxu0
  %v449 = vsel %vm232, %v318, 0
  %v452 = vsel %vm232, %v321, 0
  %454 = vmatpush.msra.mxu0 0.0
  %455 = vmatpush.msra.mxu0 0.0
  %456 = vmatpush.msra.mxu0 0.0
  %457 = vmatpush.msra.mxu0 0.0
  %458 = vmatpush.msra.mxu0 0.0
  %459 = vmatpush.msra.mxu0 0.0
  %460 = vmatpush.msra.mxu0 0.0
  %461 = vmatpush.msra.mxu0 0.0
  %462 = vmatpush.msra.mxu0 0.0
  %463 = vmatpush.msra.mxu0 0.0
  %464 = vmatpush.msra.mxu0 0.0
  %465 = vmatpush.msra.mxu0 0.0
  %466 = vmatpush.msra.mxu0 0.0
  %467 = vmatpush.msra.mxu0 0.0
  %468 = vmatpush.msra.mxu0 %v221
  %469 = vmatpush.msra.mxu0 %v220
  %470 = vmatmul.f32.gmra.mxu0 %v449
  %v471 = vpop.f32.mrf.mxu0
  %v472 = vadd.f32 %v443, %v471
  %473 = vmatmul.f32.gmra.mxu0 %v452
  %v474 = vpop.f32.mrf.mxu0
  %v475 = vadd.f32 %v446, %v474
  %476 = vdwg.mxu0
  %v477 = vld [vmem:[%s9] sm:$0x1]
  %v479 = vperm.slane %v477, 0
  %v481 = vadd.f32 %v472, %v479
  %v482 = vadd.f32 %v475, %v479
  %v483 = vadd.f32 %v181, %v481
  %v484 = vadd.f32 %v182, %v482
  %v485 = vld [vmem:[%s10] sm:$0x1]
  %v486 = vld [vmem:[%s11] sm:$0x1]
  %v487 = vsel %vm121, %v483, 0.0
  %488 = vadd.xlane.f32.xlu0 %v487
  %v489 = vpop.xlane.xlu0 %488
  %v490 = vsel %vm121, %v484, 0.0
  %491 = vadd.xlane.f32.xlu0 %v490
  %v492 = vpop.xlane.xlu0 %491
  %v493 = vmul.f32 %v489, %v134
  %v494 = vmul.f32 %v492, %v134
  %v495 = vsub.f32 %v483, %v493
  %v496 = vsub.f32 %v484, %v494
  %v497 = vmul.f32 %v495, %v495
  %v498 = vmul.f32 %v496, %v496
  %v499 = vsel %vm121, %v497, 0.0
  %500 = vadd.xlane.f32.xlu0 %v499
  %v501 = vpop.xlane.xlu0 %500
  %v502 = vsel %vm121, %v498, 0.0
  %503 = vadd.xlane.f32.xlu0 %v502
  %v504 = vpop.xlane.xlu0 %503
  %v505 = vmul.f32 %v501, %v134
  %v506 = vmul.f32 %v504, %v134
  %v507 = vadd.f32 %v505, 1e-12
  %v508 = vadd.f32 %v506, 1e-12
  %v509 = vrsqrt.pop %v507
  %v510 = vmul.f32 %v509, %v507
  %v511 = vmul.f32 %v510, %v509
  %v512 = vmul.f32 0.5, %v511
  %v513 = vsub.f32 1.5, %v512
  %v514 = vmul.f32 %v509, %v513
  %vm515 = vweird.f32 %v507
  %vm516 = vweird.f32 %v509
  %vm517 = vmor %vm515, %vm516
  %v518 = vsel %vm517, %v509, %v514
  %v519 = vrsqrt.pop %v508
  %v520 = vmul.f32 %v519, %v508
  %v521 = vmul.f32 %v520, %v519
  %v522 = vmul.f32 0.5, %v521
  %v523 = vsub.f32 1.5, %v522
  %v524 = vmul.f32 %v519, %v523
  %vm525 = vweird.f32 %v508
  %vm526 = vweird.f32 %v519
  %vm527 = vmor %vm525, %vm526
  %v528 = vsel %vm527, %v519, %v524
  %v529 = vmul.f32 %v495, %v518
  %v530 = vmul.f32 %v496, %v528
  %v532 = vperm.slane %v485, 0
  %v534 = vmul.f32 %v529, %v532
  %v535 = vmul.f32 %v530, %v532
  %v537 = vperm.slane %v486, 0
  %v539 = vadd.f32 %v534, %v537
  %v540 = vadd.f32 %v535, %v537
  %v541 = vld [vmem:[%s12] sm:$0xff]
  %v542 = vld [vmem:[%s12 + $0x8] sm:$0xff]
  %v543 = vld [vmem:[%s12 + $0x10] sm:$0xff]
  %v544 = vld [vmem:[%s12 + $0x18] sm:$0xff]
  %v545 = vld [vmem:[%s13] sm:$0x1]
  %v547 = vperm.slane %v545, 0
  %v550 = vsel %vm121, %v539, 0
  %v553 = vsel %vm121, %v540, 0
  %555 = vmatpush.msra.mxu0 0.0
  %556 = vmatpush.msra.mxu0 0.0
  %557 = vmatpush.msra.mxu0 0.0
  %558 = vmatpush.msra.mxu0 0.0
  %559 = vmatpush.msra.mxu0 0.0
  %560 = vmatpush.msra.mxu0 0.0
  %561 = vmatpush.msra.mxu0 0.0
  %562 = vmatpush.msra.mxu0 0.0
  %563 = vmatpush.msra.mxu0 0.0
  %564 = vmatpush.msra.mxu0 0.0
  %565 = vmatpush.msra.mxu0 0.0
  %566 = vmatpush.msra.mxu0 0.0
  %567 = vmatpush.msra.mxu0 %v544
  %568 = vmatpush.msra.mxu0 %v543
  %569 = vmatpush.msra.mxu0 %v542
  %570 = vmatpush.msra.mxu0 %v541
  %571 = vmatmul.f32.gmra.mxu0 %v550
  %v572 = vpop.f32.mrf.mxu0
  %v573 = vadd.f32 %v547, %v572
  %574 = vmatmul.f32.gmra.mxu0 %v553
  %v575 = vpop.f32.mrf.mxu0
  %v576 = vadd.f32 %v547, %v575
  %577 = vdwg.mxu0
  %v578 = vmul.f32 %v573, %v573
  %v579 = vmul.f32 %v576, %v576
  %v580 = vmul.f32 %v573, %v578
  %v581 = vmul.f32 %v576, %v579
  %v582 = vmul.f32 %v580, 0.044715
  %v583 = vmul.f32 %v581, 0.044715
  %v584 = vadd.f32 %v573, %v582
  %v585 = vadd.f32 %v576, %v583
  %v586 = vmul.f32 %v584, 0.7978846
  %v587 = vmul.f32 %v585, 0.7978846
  %v588 = vtanh.pop %v586
  %v589 = vtanh.pop %v587
  %v590 = vadd.f32 %v588, 1.0
  %v591 = vadd.f32 %v589, 1.0
  %v592 = vmul.f32 %v590, 0.5
  %v593 = vmul.f32 %v591, 0.5
  %v594 = vmul.f32 %v573, %v592
  %v595 = vmul.f32 %v576, %v593
  %v596 = vld [vmem:[%s14] sm:$0xff]
  %v597 = vld [vmem:[%s14 + $0x8] sm:$0xff]
  %v598 = vld [vmem:[%s14 + $0x10] sm:$0xff]
  %v599 = vld [vmem:[%s14 + $0x18] sm:$0xff]
  %v600 = vld [vmem:[%s14 + $0x20] sm:$0xff]
  %v601 = vld [vmem:[%s14 + $0x28] sm:$0xff]
  %v602 = vld [vmem:[%s14 + $0x30] sm:$0xff]
  %v603 = vld [vmem:[%s14 + $0x38] sm:$0xff]
  %v604 = vld [vmem:[%s15] sm:$0x1]
  %v606 = vperm.slane %v604, 0
  %vm608 = vcmask 523264
  %v610 = vsel %vm608, %v594, 0
  %v613 = vsel %vm608, %v595, 0
  %615 = vmatpush.msra.mxu0 0.0
  %616 = vmatpush.msra.mxu0 0.0
  %617 = vmatpush.msra.mxu0 0.0
  %618 = vmatpush.msra.mxu0 0.0
  %619 = vmatpush.msra.mxu0 0.0
  %620 = vmatpush.msra.mxu0 0.0
  %621 = vmatpush.msra.mxu0 0.0
  %622 = vmatpush.msra.mxu0 0.0
  %623 = vmatpush.msra.mxu0 %v603
  %624 = vmatpush.msra.mxu0 %v602
  %625 = vmatpush.msra.mxu0 %v601
  %626 = vmatpush.msra.mxu0 %v600
  %627 = vmatpush.msra.mxu0 %v599
  %628 = vmatpush.msra.mxu0 %v598
  %629 = vmatpush.msra.mxu0 %v597
  %630 = vmatpush.msra.mxu0 %v596
  %631 = vmatmul.f32.gmra.mxu0 %v610
  %v632 = vpop.f32.mrf.mxu0
  %v633 = vadd.f32 %v606, %v632
  %634 = vmatmul.f32.gmra.mxu0 %v613
  %v635 = vpop.f32.mrf.mxu0
  %v636 = vadd.f32 %v606, %v635
  %637 = vdwg.mxu0
  %v638 = vadd.f32 %v539, %v633
  %v639 = vadd.f32 %v540, %v636
  %v640 = vld [vmem:[%s16] sm:$0x1]
  %v641 = vld [vmem:[%s17] sm:$0x1]
  %v642 = vsel %vm121, %v638, 0.0
  %643 = vadd.xlane.f32.xlu0 %v642
  %v644 = vpop.xlane.xlu0 %643
  %v645 = vsel %vm121, %v639, 0.0
  %646 = vadd.xlane.f32.xlu0 %v645
  %v647 = vpop.xlane.xlu0 %646
  %v648 = vmul.f32 %v644, %v134
  %v649 = vmul.f32 %v647, %v134
  %v650 = vsub.f32 %v638, %v648
  %v651 = vsub.f32 %v639, %v649
  %v652 = vmul.f32 %v650, %v650
  %v653 = vmul.f32 %v651, %v651
  %v654 = vsel %vm121, %v652, 0.0
  %655 = vadd.xlane.f32.xlu0 %v654
  %v656 = vpop.xlane.xlu0 %655
  %v657 = vsel %vm121, %v653, 0.0
  %658 = vadd.xlane.f32.xlu0 %v657
  %v659 = vpop.xlane.xlu0 %658
  %v660 = vmul.f32 %v656, %v134
  %v661 = vmul.f32 %v659, %v134
  %v662 = vadd.f32 %v660, 1e-12
  %v663 = vadd.f32 %v661, 1e-12
  %v664 = vrsqrt.pop %v662
  %v665 = vmul.f32 %v664, %v662
  %v666 = vmul.f32 %v665, %v664
  %v667 = vmul.f32 0.5, %v666
  %v668 = vsub.f32 1.5, %v667
  %v669 = vmul.f32 %v664, %v668
  %vm670 = vweird.f32 %v662
  %vm671 = vweird.f32 %v664
  %vm672 = vmor %vm670, %vm671
  %v673 = vsel %vm672, %v664, %v669
  %v674 = vrsqrt.pop %v663
  %v675 = vmul.f32 %v674, %v663
  %v676 = vmul.f32 %v675, %v674
  %v677 = vmul.f32 0.5, %v676
  %v678 = vsub.f32 1.5, %v677
  %v679 = vmul.f32 %v674, %v678
  %vm680 = vweird.f32 %v663
  %vm681 = vweird.f32 %v674
  %vm682 = vmor %vm680, %vm681
  %v683 = vsel %vm682, %v674, %v679
  %v684 = vmul.f32 %v650, %v673
  %v685 = vmul.f32 %v651, %v683
  %v687 = vperm.slane %v640, 0
  %v689 = vmul.f32 %v684, %v687
  %v690 = vmul.f32 %v685, %v687
  %v692 = vperm.slane %v641, 0
  %v694 = vadd.f32 %v689, %v692
  %v695 = vadd.f32 %v690, %v692
  %s696 = scalar_lea.vmem %s6, 32
  %v697 = vld [vmem:[%s696] sm:$0xff]
  %v698 = vld [vmem:[%s696 + $0x8] sm:$0xff]
  %v699 = vld [vmem:[%s696 + $0x10] sm:$0xff]
  %v700 = vld [vmem:[%s696 + $0x18] sm:$0xff]
  %s701 = scalar_lea.vmem %s7, 1
  %v702 = vld [vmem:[%s701] sm:$0x1]
  %v704 = vperm.slane %v702, 0
  %v707 = vsel %vm121, %v694, 0
  %v710 = vsel %vm121, %v695, 0
  %712 = vmatpush.msra.mxu0 0.0
  %713 = vmatpush.msra.mxu0 0.0
  %714 = vmatpush.msra.mxu0 0.0
  %715 = vmatpush.msra.mxu0 0.0
  %716 = vmatpush.msra.mxu0 0.0
  %717 = vmatpush.msra.mxu0 0.0
  %718 = vmatpush.msra.mxu0 0.0
  %719 = vmatpush.msra.mxu0 0.0
  %720 = vmatpush.msra.mxu0 0.0
  %721 = vmatpush.msra.mxu0 0.0
  %722 = vmatpush.msra.mxu0 0.0
  %723 = vmatpush.msra.mxu0 0.0
  %724 = vmatpush.msra.mxu0 %v700
  %725 = vmatpush.msra.mxu0 %v699
  %726 = vmatpush.msra.mxu0 %v698
  %727 = vmatpush.msra.mxu0 %v697
  %728 = vmatmul.f32.gmra.mxu0 %v707
  %v729 = vpop.f32.mrf.mxu0
  %v730 = vadd.f32 %v704, %v729
  %731 = vmatmul.f32.gmra.mxu0 %v710
  %v732 = vpop.f32.mrf.mxu0
  %v733 = vadd.f32 %v704, %v732
  %734 = vdwg.mxu0
  %s735 = scalar_lea.vmem %s8, 32
  %v736 = vld [vmem:[%s735] sm:$0xff]
  %v737 = vld [vmem:[%s735 + $0x8] sm:$0xff]
  %v738 = vld [vmem:[%s735 + $0x10] sm:$0xff]
  %v739 = vld [vmem:[%s735 + $0x18] sm:$0xff]
  %v740 = vmul.f32 %v730, 0.25
  %v741 = vmul.f32 %v733, 0.25
  %744 = vrot.lane.b32.xlu0 %v730, 96
  %v745 = vpop.permute.xlu0 %744
  %746 = vrot.lane.b32.xlu0 %v733, 96
  %v747 = vpop.permute.xlu0 %746
  %v749 = vsel %vm232, %v740, 0
  %v752 = vsel %vm232, %v741, 0
  %v754 = vsel %vm232, %v745, 0
  %v756 = vsel %vm232, %v747, 0
  %758 = vmatpush.xpose.msra.mxu0 0.0
  %759 = vmatpush.xpose.msra.mxu0 0.0
  %760 = vmatpush.xpose.msra.mxu0 0.0
  %761 = vmatpush.xpose.msra.mxu0 0.0
  %762 = vmatpush.xpose.msra.mxu0 0.0
  %763 = vmatpush.xpose.msra.mxu0 0.0
  %764 = vmatpush.xpose.msra.mxu0 0.0
  %765 = vmatpush.xpose.msra.mxu0 0.0
  %766 = vmatpush.xpose.msra.mxu0 0.0
  %767 = vmatpush.xpose.msra.mxu0 0.0
  %768 = vmatpush.xpose.msra.mxu0 0.0
  %769 = vmatpush.xpose.msra.mxu0 0.0
  %770 = vmatpush.xpose.msra.mxu0 0.0
  %771 = vmatpush.xpose.msra.mxu0 0.0
  %772 = vmatpush.xpose.msra.mxu0 %v756
  %773 = vmatpush.xpose.msra.mxu0 %v754
  %774 = vmatmul.f32.gmra.mxu0 %v749
  %v775 = vpop.f32.mrf.mxu0
  %v776 = vadd.f32 %v115, %v775
  %777 = vmatmul.f32.gmra.mxu0 %v752
  %v778 = vpop.f32.mrf.mxu0
  %v779 = vadd.f32 %v116, %v778
  %780 = vdwg.mxu0
  %v781 = vsel %vm232, %v776, -inf
  %782 = vmax.xlane.f32.xlu0 %v781
  %v783 = vpop.xlane.xlu0 %782
  %v784 = vsel %vm232, %v779, -inf
  %785 = vmax.xlane.f32.xlu0 %v784
  %v786 = vpop.xlane.xlu0 %785
  %v787 = vsub.f32 %v776, %v783
  %v788 = vsub.f32 %v779, %v786
  %v789 = vmul.f32 %v787, 1.442695
  %v790 = vpow.pop %v789
  %v791 = vmul.f32 %v788, 1.442695
  %v792 = vpow.pop %v791
  %v793 = vsel %vm232, %v790, 0.0
  %794 = vadd.xlane.f32.xlu0 %v793
  %v795 = vpop.xlane.xlu0 %794
  %v796 = vsel %vm232, %v792, 0.0
  %797 = vadd.xlane.f32.xlu0 %v796
  %v798 = vpop.xlane.xlu0 %797
  %v799 = vrcp.pop %v795
  %v800 = vrcp.pop %v798
  %v801 = vmul.f32 %v790, %v799
  %v802 = vmul.f32 %v792, %v800
  %803 = vrot.lane.b32.xlu0 %v730, 64
  %v804 = vpop.permute.xlu0 %803
  %805 = vrot.lane.b32.xlu0 %v733, 64
  %v806 = vpop.permute.xlu0 %805
  %v810 = vsel %vm232, %v801, 0
  %v813 = vsel %vm232, %v802, 0
  %815 = vmatpush.msra.mxu0 0.0
  %816 = vmatpush.msra.mxu0 0.0
  %817 = vmatpush.msra.mxu0 0.0
  %818 = vmatpush.msra.mxu0 0.0
  %819 = vmatpush.msra.mxu0 0.0
  %820 = vmatpush.msra.mxu0 0.0
  %821 = vmatpush.msra.mxu0 0.0
  %822 = vmatpush.msra.mxu0 0.0
  %823 = vmatpush.msra.mxu0 0.0
  %824 = vmatpush.msra.mxu0 0.0
  %825 = vmatpush.msra.mxu0 0.0
  %826 = vmatpush.msra.mxu0 0.0
  %827 = vmatpush.msra.mxu0 0.0
  %828 = vmatpush.msra.mxu0 0.0
  %829 = vmatpush.msra.mxu0 %v806
  %830 = vmatpush.msra.mxu0 %v804
  %831 = vmatmul.f32.gmra.mxu0 %v810
  %v832 = vpop.f32.mrf.mxu0
  %v833 = vadd.f32 0.0, %v832
  %834 = vmatmul.f32.gmra.mxu0 %v813
  %v835 = vpop.f32.mrf.mxu0
  %v836 = vadd.f32 0.0, %v835
  %837 = vdwg.mxu0
  %838 = vrot.lane.b32.xlu0 %v740, 112
  %v839 = vpop.permute.xlu0 %838
  %840 = vrot.lane.b32.xlu0 %v741, 112
  %v841 = vpop.permute.xlu0 %840
  %842 = vrot.lane.b32.xlu0 %v730, 80
  %v843 = vpop.permute.xlu0 %842
  %844 = vrot.lane.b32.xlu0 %v733, 80
  %v845 = vpop.permute.xlu0 %844
  %v846 = vsel %vm232, %v839, 0
  %v848 = vsel %vm232, %v841, 0
  %v850 = vsel %vm232, %v843, 0
  %v852 = vsel %vm232, %v845, 0
  %854 = vmatpush.xpose.msra.mxu0 0.0
  %855 = vmatpush.xpose.msra.mxu0 0.0
  %856 = vmatpush.xpose.msra.mxu0 0.0
  %857 = vmatpush.xpose.msra.mxu0 0.0
  %858 = vmatpush.xpose.msra.mxu0 0.0
  %859 = vmatpush.xpose.msra.mxu0 0.0
  %860 = vmatpush.xpose.msra.mxu0 0.0
  %861 = vmatpush.xpose.msra.mxu0 0.0
  %862 = vmatpush.xpose.msra.mxu0 0.0
  %863 = vmatpush.xpose.msra.mxu0 0.0
  %864 = vmatpush.xpose.msra.mxu0 0.0
  %865 = vmatpush.xpose.msra.mxu0 0.0
  %866 = vmatpush.xpose.msra.mxu0 0.0
  %867 = vmatpush.xpose.msra.mxu0 0.0
  %868 = vmatpush.xpose.msra.mxu0 %v852
  %869 = vmatpush.xpose.msra.mxu0 %v850
  %870 = vmatmul.f32.gmra.mxu0 %v846
  %v871 = vpop.f32.mrf.mxu0
  %v872 = vadd.f32 %v115, %v871
  %873 = vmatmul.f32.gmra.mxu0 %v848
  %v874 = vpop.f32.mrf.mxu0
  %v875 = vadd.f32 %v116, %v874
  %876 = vdwg.mxu0
  %v877 = vsel %vm232, %v872, -inf
  %878 = vmax.xlane.f32.xlu0 %v877
  %v879 = vpop.xlane.xlu0 %878
  %v880 = vsel %vm232, %v875, -inf
  %881 = vmax.xlane.f32.xlu0 %v880
  %v882 = vpop.xlane.xlu0 %881
  %v883 = vsub.f32 %v872, %v879
  %v884 = vsub.f32 %v875, %v882
  %v885 = vmul.f32 %v883, 1.442695
  %v886 = vpow.pop %v885
  %v887 = vmul.f32 %v884, 1.442695
  %v888 = vpow.pop %v887
  %v889 = vsel %vm232, %v886, 0.0
  %890 = vadd.xlane.f32.xlu0 %v889
  %v891 = vpop.xlane.xlu0 %890
  %v892 = vsel %vm232, %v888, 0.0
  %893 = vadd.xlane.f32.xlu0 %v892
  %v894 = vpop.xlane.xlu0 %893
  %v895 = vrcp.pop %v891
  %v896 = vrcp.pop %v894
  %v897 = vmul.f32 %v886, %v895
  %v898 = vmul.f32 %v888, %v896
  %899 = vrot.lane.b32.xlu0 %v730, 48
  %v900 = vpop.permute.xlu0 %899
  %901 = vrot.lane.b32.xlu0 %v733, 48
  %v902 = vpop.permute.xlu0 %901
  %v906 = vsel %vm232, %v897, 0
  %v909 = vsel %vm232, %v898, 0
  %911 = vmatpush.msra.mxu0 0.0
  %912 = vmatpush.msra.mxu0 0.0
  %913 = vmatpush.msra.mxu0 0.0
  %914 = vmatpush.msra.mxu0 0.0
  %915 = vmatpush.msra.mxu0 0.0
  %916 = vmatpush.msra.mxu0 0.0
  %917 = vmatpush.msra.mxu0 0.0
  %918 = vmatpush.msra.mxu0 0.0
  %919 = vmatpush.msra.mxu0 0.0
  %920 = vmatpush.msra.mxu0 0.0
  %921 = vmatpush.msra.mxu0 0.0
  %922 = vmatpush.msra.mxu0 0.0
  %923 = vmatpush.msra.mxu0 0.0
  %924 = vmatpush.msra.mxu0 0.0
  %925 = vmatpush.msra.mxu0 %v902
  %926 = vmatpush.msra.mxu0 %v900
  %927 = vmatmul.f32.gmra.mxu0 %v906
  %v928 = vpop.f32.mrf.mxu0
  %v929 = vadd.f32 0.0, %v928
  %930 = vmatmul.f32.gmra.mxu0 %v909
  %v931 = vpop.f32.mrf.mxu0
  %v932 = vadd.f32 0.0, %v931
  %933 = vdwg.mxu0
  %v935 = vsel %vm232, %v929, 0
  %v938 = vsel %vm232, %v932, 0
  %940 = vmatpush.msra.mxu0 0.0
  %941 = vmatpush.msra.mxu0 0.0
  %942 = vmatpush.msra.mxu0 0.0
  %943 = vmatpush.msra.mxu0 0.0
  %944 = vmatpush.msra.mxu0 0.0
  %945 = vmatpush.msra.mxu0 0.0
  %946 = vmatpush.msra.mxu0 0.0
  %947 = vmatpush.msra.mxu0 0.0
  %948 = vmatpush.msra.mxu0 0.0
  %949 = vmatpush.msra.mxu0 0.0
  %950 = vmatpush.msra.mxu0 0.0
  %951 = vmatpush.msra.mxu0 0.0
  %952 = vmatpush.msra.mxu0 0.0
  %953 = vmatpush.msra.mxu0 0.0
  %954 = vmatpush.msra.mxu0 %v739
  %955 = vmatpush.msra.mxu0 %v738
  %956 = vmatmul.f32.gmra.mxu0 %v935
  %v957 = vpop.f32.mrf.mxu0
  %v958 = vadd.f32 0.0, %v957
  %959 = vmatmul.f32.gmra.mxu0 %v938
  %v960 = vpop.f32.mrf.mxu0
  %v961 = vadd.f32 0.0, %v960
  %962 = vdwg.mxu0
  %v964 = vsel %vm232, %v833, 0
  %v967 = vsel %vm232, %v836, 0
  %969 = vmatpush.msra.mxu0 0.0
  %970 = vmatpush.msra.mxu0 0.0
  %971 = vmatpush.msra.mxu0 0.0
  %972 = vmatpush.msra.mxu0 0.0
  %973 = vmatpush.msra.mxu0 0.0
  %974 = vmatpush.msra.mxu0 0.0
  %975 = vmatpush.msra.mxu0 0.0
  %976 = vmatpush.msra.mxu0 0.0
  %977 = vmatpush.msra.mxu0 0.0
  %978 = vmatpush.msra.mxu0 0.0
  %979 = vmatpush.msra.mxu0 0.0
  %980 = vmatpush.msra.mxu0 0.0
  %981 = vmatpush.msra.mxu0 0.0
  %982 = vmatpush.msra.mxu0 0.0
  %983 = vmatpush.msra.mxu0 %v737
  %984 = vmatpush.msra.mxu0 %v736
  %985 = vmatmul.f32.gmra.mxu0 %v964
  %v986 = vpop.f32.mrf.mxu0
  %v987 = vadd.f32 %v958, %v986
  %988 = vmatmul.f32.gmra.mxu0 %v967
  %v989 = vpop.f32.mrf.mxu0
  %v990 = vadd.f32 %v961, %v989
  %991 = vdwg.mxu0
  %s992 = scalar_lea.vmem %s9, 1
  %v993 = vld [vmem:[%s992] sm:$0x1]
  %v995 = vperm.slane %v993, 0
  %v997 = vadd.f32 %v987, %v995
  %v998 = vadd.f32 %v990, %v995
  %v999 = vadd.f32 %v694, %v997
  %v1000 = vadd.f32 %v695, %v998
  %s1001 = scalar_lea.vmem %s10, 1
  %v1002 = vld [vmem:[%s1001] sm:$0x1]
  %s1003 = scalar_lea.vmem %s11, 1
  %v1004 = vld [vmem:[%s1003] sm:$0x1]
  %v1005 = vsel %vm121, %v999, 0.0
  %1006 = vadd.xlane.f32.xlu0 %v1005
  %v1007 = vpop.xlane.xlu0 %1006
  %v1008 = vsel %vm121, %v1000, 0.0
  %1009 = vadd.xlane.f32.xlu0 %v1008
  %v1010 = vpop.xlane.xlu0 %1009
  %v1011 = vmul.f32 %v1007, %v134
  %v1012 = vmul.f32 %v1010, %v134
  %v1013 = vsub.f32 %v999, %v1011
  %v1014 = vsub.f32 %v1000, %v1012
  %v1015 = vmul.f32 %v1013, %v1013
  %v1016 = vmul.f32 %v1014, %v1014
  %v1017 = vsel %vm121, %v1015, 0.0
  %1018 = vadd.xlane.f32.xlu0 %v1017
  %v1019 = vpop.xlane.xlu0 %1018
  %v1020 = vsel %vm121, %v1016, 0.0
  %1021 = vadd.xlane.f32.xlu0 %v1020
  %v1022 = vpop.xlane.xlu0 %1021
  %v1023 = vmul.f32 %v1019, %v134
  %v1024 = vmul.f32 %v1022, %v134
  %v1025 = vadd.f32 %v1023, 1e-12
  %v1026 = vadd.f32 %v1024, 1e-12
  %v1027 = vrsqrt.pop %v1025
  %v1028 = vmul.f32 %v1027, %v1025
  %v1029 = vmul.f32 %v1028, %v1027
  %v1030 = vmul.f32 0.5, %v1029
  %v1031 = vsub.f32 1.5, %v1030
  %v1032 = vmul.f32 %v1027, %v1031
  %vm1033 = vweird.f32 %v1025
  %vm1034 = vweird.f32 %v1027
  %vm1035 = vmor %vm1033, %vm1034
  %v1036 = vsel %vm1035, %v1027, %v1032
  %v1037 = vrsqrt.pop %v1026
  %v1038 = vmul.f32 %v1037, %v1026
  %v1039 = vmul.f32 %v1038, %v1037
  %v1040 = vmul.f32 0.5, %v1039
  %v1041 = vsub.f32 1.5, %v1040
  %v1042 = vmul.f32 %v1037, %v1041
  %vm1043 = vweird.f32 %v1026
  %vm1044 = vweird.f32 %v1037
  %vm1045 = vmor %vm1043, %vm1044
  %v1046 = vsel %vm1045, %v1037, %v1042
  %v1047 = vmul.f32 %v1013, %v1036
  %v1048 = vmul.f32 %v1014, %v1046
  %v1050 = vperm.slane %v1002, 0
  %v1052 = vmul.f32 %v1047, %v1050
  %v1053 = vmul.f32 %v1048, %v1050
  %v1055 = vperm.slane %v1004, 0
  %v1057 = vadd.f32 %v1052, %v1055
  %v1058 = vadd.f32 %v1053, %v1055
  %s1059 = scalar_lea.vmem %s12, 32
  %v1060 = vld [vmem:[%s1059] sm:$0xff]
  %v1061 = vld [vmem:[%s1059 + $0x8] sm:$0xff]
  %v1062 = vld [vmem:[%s1059 + $0x10] sm:$0xff]
  %v1063 = vld [vmem:[%s1059 + $0x18] sm:$0xff]
  %s1064 = scalar_lea.vmem %s13, 1
  %v1065 = vld [vmem:[%s1064] sm:$0x1]
  %v1067 = vperm.slane %v1065, 0
  %v1070 = vsel %vm121, %v1057, 0
  %v1073 = vsel %vm121, %v1058, 0
  %1075 = vmatpush.msra.mxu0 0.0
  %1076 = vmatpush.msra.mxu0 0.0
  %1077 = vmatpush.msra.mxu0 0.0
  %1078 = vmatpush.msra.mxu0 0.0
  %1079 = vmatpush.msra.mxu0 0.0
  %1080 = vmatpush.msra.mxu0 0.0
  %1081 = vmatpush.msra.mxu0 0.0
  %1082 = vmatpush.msra.mxu0 0.0
  %1083 = vmatpush.msra.mxu0 0.0
  %1084 = vmatpush.msra.mxu0 0.0
  %1085 = vmatpush.msra.mxu0 0.0
  %1086 = vmatpush.msra.mxu0 0.0
  %1087 = vmatpush.msra.mxu0 %v1063
  %1088 = vmatpush.msra.mxu0 %v1062
  %1089 = vmatpush.msra.mxu0 %v1061
  %1090 = vmatpush.msra.mxu0 %v1060
  %1091 = vmatmul.f32.gmra.mxu0 %v1070
  %v1092 = vpop.f32.mrf.mxu0
  %v1093 = vadd.f32 %v1067, %v1092
  %1094 = vmatmul.f32.gmra.mxu0 %v1073
  %v1095 = vpop.f32.mrf.mxu0
  %v1096 = vadd.f32 %v1067, %v1095
  %1097 = vdwg.mxu0
  %v1098 = vmul.f32 %v1093, %v1093
  %v1099 = vmul.f32 %v1096, %v1096
  %v1100 = vmul.f32 %v1093, %v1098
  %v1101 = vmul.f32 %v1096, %v1099
  %v1102 = vmul.f32 %v1100, 0.044715
  %v1103 = vmul.f32 %v1101, 0.044715
  %v1104 = vadd.f32 %v1093, %v1102
  %v1105 = vadd.f32 %v1096, %v1103
  %v1106 = vmul.f32 %v1104, 0.7978846
  %v1107 = vmul.f32 %v1105, 0.7978846
  %v1108 = vtanh.pop %v1106
  %v1109 = vtanh.pop %v1107
  %v1110 = vadd.f32 %v1108, 1.0
  %v1111 = vadd.f32 %v1109, 1.0
  %v1112 = vmul.f32 %v1110, 0.5
  %v1113 = vmul.f32 %v1111, 0.5
  %v1114 = vmul.f32 %v1093, %v1112
  %v1115 = vmul.f32 %v1096, %v1113
  %s1116 = scalar_lea.vmem %s14, 64
  %v1117 = vld [vmem:[%s1116] sm:$0xff]
  %v1118 = vld [vmem:[%s1116 + $0x8] sm:$0xff]
  %v1119 = vld [vmem:[%s1116 + $0x10] sm:$0xff]
  %v1120 = vld [vmem:[%s1116 + $0x18] sm:$0xff]
  %v1121 = vld [vmem:[%s1116 + $0x20] sm:$0xff]
  %v1122 = vld [vmem:[%s1116 + $0x28] sm:$0xff]
  %v1123 = vld [vmem:[%s1116 + $0x30] sm:$0xff]
  %v1124 = vld [vmem:[%s1116 + $0x38] sm:$0xff]
  %s1125 = scalar_lea.vmem %s15, 1
  %v1126 = vld [vmem:[%s1125] sm:$0x1]
  %v1128 = vperm.slane %v1126, 0
  %v1131 = vsel %vm608, %v1114, 0
  %v1134 = vsel %vm608, %v1115, 0
  %1136 = vmatpush.msra.mxu0 0.0
  %1137 = vmatpush.msra.mxu0 0.0
  %1138 = vmatpush.msra.mxu0 0.0
  %1139 = vmatpush.msra.mxu0 0.0
  %1140 = vmatpush.msra.mxu0 0.0
  %1141 = vmatpush.msra.mxu0 0.0
  %1142 = vmatpush.msra.mxu0 0.0
  %1143 = vmatpush.msra.mxu0 0.0
  %1144 = vmatpush.msra.mxu0 %v1124
  %1145 = vmatpush.msra.mxu0 %v1123
  %1146 = vmatpush.msra.mxu0 %v1122
  %1147 = vmatpush.msra.mxu0 %v1121
  %1148 = vmatpush.msra.mxu0 %v1120
  %1149 = vmatpush.msra.mxu0 %v1119
  %1150 = vmatpush.msra.mxu0 %v1118
  %1151 = vmatpush.msra.mxu0 %v1117
  %1152 = vmatmul.f32.gmra.mxu0 %v1131
  %v1153 = vpop.f32.mrf.mxu0
  %v1154 = vadd.f32 %v1128, %v1153
  %1155 = vmatmul.f32.gmra.mxu0 %v1134
  %v1156 = vpop.f32.mrf.mxu0
  %v1157 = vadd.f32 %v1128, %v1156
  %1158 = vdwg.mxu0
  %v1159 = vadd.f32 %v1057, %v1154
  %v1160 = vadd.f32 %v1058, %v1157
  %s1161 = scalar_lea.vmem %s16, 1
  %v1162 = vld [vmem:[%s1161] sm:$0x1]
  %s1163 = scalar_lea.vmem %s17, 1
  %v1164 = vld [vmem:[%s1163] sm:$0x1]
  %v1165 = vsel %vm121, %v1159, 0.0
  %1166 = vadd.xlane.f32.xlu0 %v1165
  %v1167 = vpop.xlane.xlu0 %1166
  %v1168 = vsel %vm121, %v1160, 0.0
  %1169 = vadd.xlane.f32.xlu0 %v1168
  %v1170 = vpop.xlane.xlu0 %1169
  %v1171 = vmul.f32 %v1167, %v134
  %v1172 = vmul.f32 %v1170, %v134
  %v1173 = vsub.f32 %v1159, %v1171
  %v1174 = vsub.f32 %v1160, %v1172
  %v1175 = vmul.f32 %v1173, %v1173
  %v1176 = vmul.f32 %v1174, %v1174
  %v1177 = vsel %vm121, %v1175, 0.0
  %1178 = vadd.xlane.f32.xlu0 %v1177
  %v1179 = vpop.xlane.xlu0 %1178
  %v1180 = vsel %vm121, %v1176, 0.0
  %1181 = vadd.xlane.f32.xlu0 %v1180
  %v1182 = vpop.xlane.xlu0 %1181
  %v1183 = vmul.f32 %v1179, %v134
  %v1184 = vmul.f32 %v1182, %v134
  %v1185 = vadd.f32 %v1183, 1e-12
  %v1186 = vadd.f32 %v1184, 1e-12
  %v1187 = vrsqrt.pop %v1185
  %v1188 = vmul.f32 %v1187, %v1185
  %v1189 = vmul.f32 %v1188, %v1187
  %v1190 = vmul.f32 0.5, %v1189
  %v1191 = vsub.f32 1.5, %v1190
  %v1192 = vmul.f32 %v1187, %v1191
  %vm1193 = vweird.f32 %v1185
  %vm1194 = vweird.f32 %v1187
  %vm1195 = vmor %vm1193, %vm1194
  %v1196 = vsel %vm1195, %v1187, %v1192
  %v1197 = vrsqrt.pop %v1186
  %v1198 = vmul.f32 %v1197, %v1186
  %v1199 = vmul.f32 %v1198, %v1197
  %v1200 = vmul.f32 0.5, %v1199
  %v1201 = vsub.f32 1.5, %v1200
  %v1202 = vmul.f32 %v1197, %v1201
  %vm1203 = vweird.f32 %v1186
  %vm1204 = vweird.f32 %v1197
  %vm1205 = vmor %vm1203, %vm1204
  %v1206 = vsel %vm1205, %v1197, %v1202
  %v1207 = vmul.f32 %v1173, %v1196
  %v1208 = vmul.f32 %v1174, %v1206
  %v1210 = vperm.slane %v1162, 0
  %v1212 = vmul.f32 %v1207, %v1210
  %v1213 = vmul.f32 %v1208, %v1210
  %v1215 = vperm.slane %v1164, 0
  %v1217 = vadd.f32 %v1212, %v1215
  %v1218 = vadd.f32 %v1213, %v1215
  %v1219 = vld [vmem:[%s18] sm:$0xff]
  %v1220 = vld [vmem:[%s18 + $0x8] sm:$0xff]
  %v1221 = vld [vmem:[%s18 + $0x10] sm:$0xff]
  %v1222 = vld [vmem:[%s18 + $0x18] sm:$0xff]
  %v1223 = vld [vmem:[%s19] sm:$0x1]
  %v1225 = vperm.slane %v1223, 0
  %v1228 = vsel %vm121, %v1217, 0
  %v1231 = vsel %vm121, %v1218, 0
  %1233 = vmatpush.msra.mxu0 0.0
  %1234 = vmatpush.msra.mxu0 0.0
  %1235 = vmatpush.msra.mxu0 0.0
  %1236 = vmatpush.msra.mxu0 0.0
  %1237 = vmatpush.msra.mxu0 0.0
  %1238 = vmatpush.msra.mxu0 0.0
  %1239 = vmatpush.msra.mxu0 0.0
  %1240 = vmatpush.msra.mxu0 0.0
  %1241 = vmatpush.msra.mxu0 0.0
  %1242 = vmatpush.msra.mxu0 0.0
  %1243 = vmatpush.msra.mxu0 0.0
  %1244 = vmatpush.msra.mxu0 0.0
  %1245 = vmatpush.msra.mxu0 %v1222
  %1246 = vmatpush.msra.mxu0 %v1221
  %1247 = vmatpush.msra.mxu0 %v1220
  %1248 = vmatpush.msra.mxu0 %v1219
  %1249 = vmatmul.f32.gmra.mxu0 %v1228
  %v1250 = vpop.f32.mrf.mxu0
  %v1251 = vadd.f32 %v1225, %v1250
  %1252 = vmatmul.f32.gmra.mxu0 %v1231
  %v1253 = vpop.f32.mrf.mxu0
  %v1254 = vadd.f32 %v1225, %v1253
  %1255 = vdwg.mxu0
  %v1256 = vtanh.pop %v1251
  %v1257 = vtanh.pop %v1254
  %v1258 = vld [vmem:[%s24] sm:$0xff]
  %v1259 = vld [vmem:[%s24 + $0x8] sm:$0xff]
  %v1260 = vld [vmem:[%s24 + $0x10] sm:$0xff]
  %v1261 = vld [vmem:[%s24 + $0x18] sm:$0xff]
  %v1262 = vld [vmem:[%s25] sm:$0x1]
  %v1264 = vperm.slane %v1262, 0
  %v1267 = vsel %vm121, %v1256, 0
  %v1270 = vsel %vm121, %v1257, 0
  %1272 = vmatpush.msra.mxu0 0.0
  %1273 = vmatpush.msra.mxu0 0.0
  %1274 = vmatpush.msra.mxu0 0.0
  %1275 = vmatpush.msra.mxu0 0.0
  %1276 = vmatpush.msra.mxu0 0.0
  %1277 = vmatpush.msra.mxu0 0.0
  %1278 = vmatpush.msra.mxu0 0.0
  %1279 = vmatpush.msra.mxu0 0.0
  %1280 = vmatpush.msra.mxu0 0.0
  %1281 = vmatpush.msra.mxu0 0.0
  %1282 = vmatpush.msra.mxu0 0.0
  %1283 = vmatpush.msra.mxu0 0.0
  %1284 = vmatpush.msra.mxu0 %v1261
  %1285 = vmatpush.msra.mxu0 %v1260
  %1286 = vmatpush.msra.mxu0 %v1259
  %1287 = vmatpush.msra.mxu0 %v1258
  %1288 = vmatmul.f32.gmra.mxu0 %v1267
  %v1289 = vpop.f32.mrf.mxu0
  %v1290 = vadd.f32 %v1264, %v1289
  %1291 = vmatmul.f32.gmra.mxu0 %v1270
  %v1292 = vpop.f32.mrf.mxu0
  %v1293 = vadd.f32 %v1264, %v1292
  %1294 = vdwg.mxu0
  %vm1295 = vcmask 15360
  %1296 = vst.msk [vmem:[%s26] sm:$0xff] %vm1295, %v1290
  %1297 = vst.msk [vmem:[%s26 + $0x8] sm:$0xff] %vm1295, %v1293
  // Predicated region
  $region106: #{my_bert_model_forward.1} parent=0 // pred_check
    _
  $region107: #{my_bert_model_forward.1} parent=0 // pred_check_branch
    %1299 = sbr.rel (0) target = $region109
  $region108: #{my_bert_model_forward.1} parent=0 // pred_region
    _
  $region109: #{my_bert_model_forward.1} parent=0 // pred_fallthru
    _
  // Predicated region
  $region110: #{my_bert_model_forward.1} parent=0 // pred_check
    _
  $region111: #{my_bert_model_forward.1} parent=0 // pred_check_branch
    %1301 = sbr.rel (0) target = $region113
  $region112: #{my_bert_model_forward.1} parent=0 // pred_region
    _
  $region113: #{my_bert_model_forward.1} parent=0 // pred_fallthru
    _

</llo_original>
